<compile_context>
chip_gen: v5e
topology: v5e:2x2
jax: 0.10.0
libtpu: 0.0.40
codegen_flags: <defaults>
</compile_context>

<pallas_src>
import functools

import jax
import jax.numpy as jnp
from jax.experimental import pallas as pl
from jax.experimental.pallas import tpu as pltpu

EPS = 1e-5


def bottleblock_kernel(x_ref, w1_ref, w2_ref, w3_ref,
                       s1_ref, t1_ref, s2_ref, t2_ref, s3_ref, t3_ref,
                       o_ref, h1_ref, *, W, HW, M):
    """One image per grid step.

    x_ref : (1, HW, Cin) f32        w1_ref: (Cin, Cmid) bf16
    w2_ref: (9, Cmid, Cmid) bf16    w3_ref: (Cmid, Cout) bf16
    s*/t* : (1, C) f32 folded BN scale/shift (conv bias folded into t)
    o_ref : (1, M, Cout) f32, M = (H-2)*W (full-width rows; cols >= W-2 are
            junk and get cropped by the wrapper)
    h1_ref: VMEM scratch (HW + 8, Cmid) f32
    """
    cmid = w1_ref.shape[1]

    # ---- conv1 (1x1) -> bn1 -> relu : one (HW, Cin) @ (Cin, Cmid) matmul ----
    x = x_ref[0]                                               # (HW, Cin) f32
    h1 = jnp.dot(x.astype(jnp.bfloat16), w1_ref[...],
                 preferred_element_type=jnp.float32)           # (HW, Cmid) f32
    h1 = jnp.maximum(h1 * s1_ref[...] + t1_ref[...], 0.0)
    h1_ref[pl.ds(0, HW), :] = h1                               # whole-slab write
    pad = h1_ref.shape[0] - HW
    h1_ref[pl.ds(HW, pad), :] = jnp.zeros((pad, cmid), jnp.float32)

    # ---- conv2 (3x3, valid) -> bn2 -> relu : 9 shifted-slab matmuls ---------
    acc = jnp.zeros((M, cmid), jnp.float32)
    for kh in range(3):
        for kw in range(3):
            patch = h1_ref[pl.ds(kh * W + kw, M), :].astype(jnp.bfloat16)
            acc = acc + jnp.dot(patch, w2_ref[kh * 3 + kw],
                                preferred_element_type=jnp.float32)
    h2 = jnp.maximum(acc * s2_ref[...] + t2_ref[...], 0.0)     # (M, Cmid)

    # ---- conv3 (1x1) -> bn3 -> + identity (center crop) -> relu ------------
    y = jnp.dot(h2.astype(jnp.bfloat16), w3_ref[...],
                preferred_element_type=jnp.float32)            # (M, Cout)
    y = y * s3_ref[...] + t3_ref[...]
    identity = x_ref[0, pl.ds(W + 1, M), :]                    # crop-downsample
    o_ref[0] = jnp.maximum(y + identity, 0.0).astype(o_ref.dtype)   # one store


def bottleblock_forward(x_nchw, params):
    """BottleBlock forward.  x_nchw: (N, Cin, H, W) f32 -> (N, Cout, H-2, W-2)."""
    N, Cin, H, W = x_nchw.shape
    Cmid = params["w1"].shape[0]
    Cout = params["w3"].shape[0]
    assert Cin == Cout, "center-crop downsample requires in_ch == out_ch * expansion"
    Ho, Wo = H - 2, W - 2
    HW = H * W
    M = Ho * W                       # full-width output rows computed per image

    # Kernel layouts: flattened-spatial channels-last activations, (K, N) weights.
    x = jnp.transpose(x_nchw, (0, 2, 3, 1)).reshape(N, HW, Cin)
    w1 = jnp.transpose(params["w1"].reshape(Cmid, Cin)).astype(jnp.bfloat16)       # (Cin, Cmid)
    w2 = jnp.transpose(params["w2"], (2, 3, 1, 0)).reshape(9, Cmid, Cmid).astype(jnp.bfloat16)
    w3 = jnp.transpose(params["w3"].reshape(Cout, Cmid)).astype(jnp.bfloat16)      # (Cmid, Cout)

    def fold_bn(b, g, be, m, v):
        # ((conv + b) - m) * s + be  ==  conv * s + t
        s = (g * jax.lax.rsqrt(v + EPS)).astype(jnp.float32)
        t = ((b - m) * s + be).astype(jnp.float32)
        return s.reshape(1, -1), t.reshape(1, -1)

    s1, t1 = fold_bn(params["b1"], params["g1"], params["be1"], params["m1"], params["v1"])
    s2, t2 = fold_bn(params["b2"], params["g2"], params["be2"], params["m2"], params["v2"])
    s3, t3 = fold_bn(params["b3"], params["g3"], params["be3"], params["m3"], params["v3"])

    def rep0(shape):
        return pl.BlockSpec(shape, lambda n, _nd=len(shape): (0,) * _nd)

    out_flat = pl.pallas_call(
        functools.partial(bottleblock_kernel, W=W, HW=HW, M=M),
        out_shape=jax.ShapeDtypeStruct((N, M, Cout), jnp.float32),
        grid_spec=pltpu.PrefetchScalarGridSpec(
            num_scalar_prefetch=0,
            grid=(N,),                                    # one image per step
            in_specs=[
                pl.BlockSpec((1, HW, Cin), lambda n: (n, 0, 0)),
                rep0(w1.shape), rep0(w2.shape), rep0(w3.shape),
                rep0(s1.shape), rep0(t1.shape),
                rep0(s2.shape), rep0(t2.shape),
                rep0(s3.shape), rep0(t3.shape),
            ],
            out_specs=pl.BlockSpec((1, M, Cout), lambda n: (n, 0, 0)),
            # +8 zero rows so all 9 shifted slabs stay in bounds.
            scratch_shapes=[pltpu.VMEM((HW + 8, Cmid), jnp.float32)],
        ),
        compiler_params=pltpu.CompilerParams(dimension_semantics=("parallel",)),
        # TODO(synk): at real ResNet sizes (C>=256, H=W>=56) add a row-strip grid
        # axis with a 2-row halo and set vmem_limit_bytes so per-step blocks fit
        # v7x's 64 MiB VMEM.
    )(x, w1, w2, w3, s1, t1, s2, t2, s3, t3)

    # Drop the 2 invalid right-most columns of each full-width row, back to NCHW.
    out = out_flat.reshape(N, Ho, W, Cout)[:, :, :Wo, :]
    return jnp.transpose(out, (0, 3, 1, 2))


# ----------------------------- pure-JAX reference -----------------------------
def reference_forward(x, p):
    def conv(x, w, b):
        y = jax.lax.conv_general_dilated(
            x.astype(jnp.bfloat16), w.astype(jnp.bfloat16),
            window_strides=(1, 1), padding="VALID",
            dimension_numbers=("NCHW", "OIHW", "NCHW"),
            preferred_element_type=jnp.float32)
        return y + b[None, :, None, None]

    def bn(x, g, be, m, v):
        s = g * jax.lax.rsqrt(v + EPS)
        return (x - m[None, :, None, None]) * s[None, :, None, None] + be[None, :, None, None]

    out = jnp.maximum(bn(conv(x, p["w1"], p["b1"]), p["g1"], p["be1"], p["m1"], p["v1"]), 0.0)
    out = jnp.maximum(bn(conv(out, p["w2"], p["b2"]), p["g2"], p["be2"], p["m2"], p["v2"]), 0.0)
    out = bn(conv(out, p["w3"], p["b3"]), p["g3"], p["be3"], p["m3"], p["v3"])
    identity = x[:, :, 1:-1, 1:-1]                   # center-crop downsample
    return jnp.maximum(out + identity, 0.0)


if __name__ == "__main__":
    key = jax.random.PRNGKey(0)
    N, Cmid, H, W = 2, 4, 16, 16
    Cin = Cout = Cmid * 4            # expansion = 4; crop-residual needs Cin == Cout
    ks = jax.random.split(key, 20)

    x = jax.random.normal(ks[0], (N, Cin, H, W), jnp.float32)

    params = {
        # conv1 (1x1, Cin -> Cmid) + bn1 (eval mode)
        "w1": 0.2 * jax.random.normal(ks[1], (Cmid, Cin, 1, 1), jnp.float32),
        "b1": 0.1 * jax.random.normal(ks[2], (Cmid,), jnp.float32),
        "g1": 1.0 + 0.1 * jax.random.normal(ks[3], (Cmid,), jnp.float32),
        "be1": 0.1 * jax.random.normal(ks[4], (Cmid,), jnp.float32),
        "m1": 0.1 * jax.random.normal(ks[5], (Cmid,), jnp.float32),
        "v1": 0.5 + jnp.abs(jax.random.normal(ks[6], (Cmid,), jnp.float32)),
        # conv2 (3x3 valid, Cmid -> Cmid) + bn2
        "w2": 0.2 * jax.random.normal(ks[7], (Cmid, Cmid, 3, 3), jnp.float32),
        "b2": 0.1 * jax.random.normal(ks[8], (Cmid,), jnp.float32),
        "g2": 1.0 + 0.1 * jax.random.normal(ks[9], (Cmid,), jnp.float32),
        "be2": 0.1 * jax.random.normal(ks[10], (Cmid,), jnp.float32),
        "m2": 0.1 * jax.random.normal(ks[11], (Cmid,), jnp.float32),
        "v2": 0.5 + jnp.abs(jax.random.normal(ks[12], (Cmid,), jnp.float32)),
        # conv3 (1x1, Cmid -> Cout = 4*Cmid) + bn3
        "w3": 0.2 * jax.random.normal(ks[13], (Cout, Cmid, 1, 1), jnp.float32),
        "b3": 0.1 * jax.random.normal(ks[14], (Cout,), jnp.float32),
        "g3": 1.0 + 0.1 * jax.random.normal(ks[15], (Cout,), jnp.float32),
        "be3": 0.1 * jax.random.normal(ks[16], (Cout,), jnp.float32),
        "m3": 0.1 * jax.random.normal(ks[17], (Cout,), jnp.float32),
        "v3": 0.5 + jnp.abs(jax.random.normal(ks[18], (Cout,), jnp.float32)),
    }

    out = bottleblock_forward(x, params)
    out = jax.block_until_ready(out)

    ref = reference_forward(x, params)
    assert out.shape == (N, Cout, H - 2, W - 2), out.shape
    err = float(jnp.max(jnp.abs(out - ref)))
    assert jnp.allclose(out, ref, atol=2e-3, rtol=2e-3), err

    print("KERNEL_OK")
</pallas_src>

<mosaic_0001>
module attributes {stable_mosaic.version = 11 : i64} {
  func.func @bottleblock_kernel(%arg0: i32, %arg1: memref<1x256x16xf32, #tpu.memory_space<vmem>>, %arg2: memref<16x4xbf16, #tpu.memory_space<vmem>>, %arg3: memref<9x4x4xbf16, #tpu.memory_space<vmem>>, %arg4: memref<4x16xbf16, #tpu.memory_space<vmem>>, %arg5: memref<1x4xf32, #tpu.memory_space<vmem>>, %arg6: memref<1x4xf32, #tpu.memory_space<vmem>>, %arg7: memref<1x4xf32, #tpu.memory_space<vmem>>, %arg8: memref<1x4xf32, #tpu.memory_space<vmem>>, %arg9: memref<1x16xf32, #tpu.memory_space<vmem>>, %arg10: memref<1x16xf32, #tpu.memory_space<vmem>>, %arg11: memref<1x224x16xf32, #tpu.memory_space<vmem>>, %arg12: memref<264x4xf32, #tpu.memory_space<vmem>>) attributes {dimension_semantics = [#tpu.dimension_semantics<parallel>], iteration_bounds = array<i64: 2>, scalar_prefetch = 0 : i64, scratch_operands = 1 : i64, tpu.core_type = #tpu.core_type<tc>, window_params = [{transform_indices = @transform_0, window_bounds = array<i64: 1, 256, 16>}, {pipeline_mode = #tpu.pipeline_mode<synchronous>, transform_indices = @transform_1, window_bounds = array<i64: 16, 4>}, {pipeline_mode = #tpu.pipeline_mode<synchronous>, transform_indices = @transform_2, window_bounds = array<i64: 9, 4, 4>}, {pipeline_mode = #tpu.pipeline_mode<synchronous>, transform_indices = @transform_3, window_bounds = array<i64: 4, 16>}, {pipeline_mode = #tpu.pipeline_mode<synchronous>, transform_indices = @transform_4, window_bounds = array<i64: 1, 4>}, {pipeline_mode = #tpu.pipeline_mode<synchronous>, transform_indices = @transform_5, window_bounds = array<i64: 1, 4>}, {pipeline_mode = #tpu.pipeline_mode<synchronous>, transform_indices = @transform_6, window_bounds = array<i64: 1, 4>}, {pipeline_mode = #tpu.pipeline_mode<synchronous>, transform_indices = @transform_7, window_bounds = array<i64: 1, 4>}, {pipeline_mode = #tpu.pipeline_mode<synchronous>, transform_indices = @transform_8, window_bounds = array<i64: 1, 16>}, {pipeline_mode = #tpu.pipeline_mode<synchronous>, transform_indices = @transform_9, window_bounds = array<i64: 1, 16>}, {transform_indices = @transform_10, window_bounds = array<i64: 1, 224, 16>}]} {
    %c0 = arith.constant 0 : index
    %c0_0 = arith.constant 0 : index
    %c0_1 = arith.constant 0 : index
    %0 = vector.load %arg1[%c0, %c0_0, %c0_1] : memref<1x256x16xf32, #tpu.memory_space<vmem>>, vector<1x256x16xf32>
    %1 = vector.shape_cast %0 : vector<1x256x16xf32> to vector<256x16xf32>
    %2 = arith.truncf %1 : vector<256x16xf32> to vector<256x16xbf16>
    %c0_2 = arith.constant 0 : index
    %c0_3 = arith.constant 0 : index
    %3 = vector.load %arg2[%c0_2, %c0_3] : memref<16x4xbf16, #tpu.memory_space<vmem>>, vector<16x4xbf16>
    %cst = arith.constant dense<0.000000e+00> : vector<256x4xf32>
    %4 = tpu.matmul %2, %3, %cst {dimension_numbers = #tpu.dot_dimension_numbers<[1], [0], [0], [1], [0, 0, 1, 1], [], []>} : vector<256x16xbf16>, vector<16x4xbf16>, vector<256x4xf32> -> vector<256x4xf32>
    %c0_4 = arith.constant 0 : index
    %c0_5 = arith.constant 0 : index
    %5 = vector.load %arg5[%c0_4, %c0_5] : memref<1x4xf32, #tpu.memory_space<vmem>>, vector<1x4xf32>
    %6 = vector.broadcast %5 : vector<1x4xf32> to vector<256x4xf32>
    %7 = arith.mulf %4, %6 : vector<256x4xf32>
    %c0_6 = arith.constant 0 : index
    %c0_7 = arith.constant 0 : index
    %8 = vector.load %arg6[%c0_6, %c0_7] : memref<1x4xf32, #tpu.memory_space<vmem>>, vector<1x4xf32>
    %9 = vector.broadcast %8 : vector<1x4xf32> to vector<256x4xf32>
    %10 = arith.addf %7, %9 : vector<256x4xf32>
    %cst_8 = arith.constant 0.000000e+00 : f32
    %11 = vector.broadcast %cst_8 : f32 to vector<256x4xf32>
    %12 = arith.maximumf %10, %11 : vector<256x4xf32>
    %c0_9 = arith.constant 0 : index
    %c0_10 = arith.constant 0 : index
    %13 = vector.load %arg12[%c0_9, %c0_10] : memref<264x4xf32, #tpu.memory_space<vmem>>, vector<256x4xf32>
    tpu.vector_store %arg12[%c0_9, %c0_10], %12 {strides = array<i32>} : memref<264x4xf32, #tpu.memory_space<vmem>>, vector<256x4xf32>,
    %cst_11 = arith.constant 0.000000e+00 : f32
    %14 = vector.broadcast %cst_11 : f32 to vector<8x4xf32>
    %c256 = arith.constant 256 : index
    %c0_12 = arith.constant 0 : index
    %15 = vector.load %arg12[%c256, %c0_12] : memref<264x4xf32, #tpu.memory_space<vmem>>, vector<8x4xf32>
    tpu.vector_store %arg12[%c256, %c0_12], %14 {strides = array<i32>} : memref<264x4xf32, #tpu.memory_space<vmem>>, vector<8x4xf32>,
    %cst_13 = arith.constant 0.000000e+00 : f32
    %16 = vector.broadcast %cst_13 : f32 to vector<224x4xf32>
    %c0_14 = arith.constant 0 : index
    %c0_15 = arith.constant 0 : index
    %17 = vector.load %arg12[%c0_14, %c0_15] : memref<264x4xf32, #tpu.memory_space<vmem>>, vector<224x4xf32>
    %18 = arith.truncf %17 : vector<224x4xf32> to vector<224x4xbf16>
    %c0_16 = arith.constant 0 : index
    %c0_17 = arith.constant 0 : index
    %c0_18 = arith.constant 0 : index
    %19 = vector.load %arg3[%c0_16, %c0_17, %c0_18] : memref<9x4x4xbf16, #tpu.memory_space<vmem>>, vector<1x4x4xbf16>
    %20 = vector.shape_cast %19 : vector<1x4x4xbf16> to vector<4x4xbf16>
    %cst_19 = arith.constant dense<0.000000e+00> : vector<224x4xf32>
    %21 = tpu.matmul %18, %20, %cst_19 {dimension_numbers = #tpu.dot_dimension_numbers<[1], [0], [0], [1], [0, 0, 1, 1], [], []>} : vector<224x4xbf16>, vector<4x4xbf16>, vector<224x4xf32> -> vector<224x4xf32>
    %22 = arith.addf %16, %21 : vector<224x4xf32>
    %c1 = arith.constant 1 : index
    %c0_20 = arith.constant 0 : index
    %23 = vector.load %arg12[%c1, %c0_20] : memref<264x4xf32, #tpu.memory_space<vmem>>, vector<224x4xf32>
    %24 = arith.truncf %23 : vector<224x4xf32> to vector<224x4xbf16>
    %c1_21 = arith.constant 1 : index
    %c0_22 = arith.constant 0 : index
    %c0_23 = arith.constant 0 : index
    %25 = vector.load %arg3[%c1_21, %c0_22, %c0_23] : memref<9x4x4xbf16, #tpu.memory_space<vmem>>, vector<1x4x4xbf16>
    %26 = vector.shape_cast %25 : vector<1x4x4xbf16> to vector<4x4xbf16>
    %cst_24 = arith.constant dense<0.000000e+00> : vector<224x4xf32>
    %27 = tpu.matmul %24, %26, %cst_24 {dimension_numbers = #tpu.dot_dimension_numbers<[1], [0], [0], [1], [0, 0, 1, 1], [], []>} : vector<224x4xbf16>, vector<4x4xbf16>, vector<224x4xf32> -> vector<224x4xf32>
    %28 = arith.addf %22, %27 : vector<224x4xf32>
    %c2 = arith.constant 2 : index
    %c0_25 = arith.constant 0 : index
    %29 = vector.load %arg12[%c2, %c0_25] : memref<264x4xf32, #tpu.memory_space<vmem>>, vector<224x4xf32>
    %30 = arith.truncf %29 : vector<224x4xf32> to vector<224x4xbf16>
    %c2_26 = arith.constant 2 : index
    %c0_27 = arith.constant 0 : index
    %c0_28 = arith.constant 0 : index
    %31 = vector.load %arg3[%c2_26, %c0_27, %c0_28] : memref<9x4x4xbf16, #tpu.memory_space<vmem>>, vector<1x4x4xbf16>
    %32 = vector.shape_cast %31 : vector<1x4x4xbf16> to vector<4x4xbf16>
    %cst_29 = arith.constant dense<0.000000e+00> : vector<224x4xf32>
    %33 = tpu.matmul %30, %32, %cst_29 {dimension_numbers = #tpu.dot_dimension_numbers<[1], [0], [0], [1], [0, 0, 1, 1], [], []>} : vector<224x4xbf16>, vector<4x4xbf16>, vector<224x4xf32> -> vector<224x4xf32>
    %34 = arith.addf %28, %33 : vector<224x4xf32>
    %c16 = arith.constant 16 : index
    %c0_30 = arith.constant 0 : index
    %35 = vector.load %arg12[%c16, %c0_30] : memref<264x4xf32, #tpu.memory_space<vmem>>, vector<224x4xf32>
    %36 = arith.truncf %35 : vector<224x4xf32> to vector<224x4xbf16>
    %c3 = arith.constant 3 : index
    %c0_31 = arith.constant 0 : index
    %c0_32 = arith.constant 0 : index
    %37 = vector.load %arg3[%c3, %c0_31, %c0_32] : memref<9x4x4xbf16, #tpu.memory_space<vmem>>, vector<1x4x4xbf16>
    %38 = vector.shape_cast %37 : vector<1x4x4xbf16> to vector<4x4xbf16>
    %cst_33 = arith.constant dense<0.000000e+00> : vector<224x4xf32>
    %39 = tpu.matmul %36, %38, %cst_33 {dimension_numbers = #tpu.dot_dimension_numbers<[1], [0], [0], [1], [0, 0, 1, 1], [], []>} : vector<224x4xbf16>, vector<4x4xbf16>, vector<224x4xf32> -> vector<224x4xf32>
    %40 = arith.addf %34, %39 : vector<224x4xf32>
    %c17 = arith.constant 17 : index
    %c0_34 = arith.constant 0 : index
    %41 = vector.load %arg12[%c17, %c0_34] : memref<264x4xf32, #tpu.memory_space<vmem>>, vector<224x4xf32>
    %42 = arith.truncf %41 : vector<224x4xf32> to vector<224x4xbf16>
    %c4 = arith.constant 4 : index
    %c0_35 = arith.constant 0 : index
    %c0_36 = arith.constant 0 : index
    %43 = vector.load %arg3[%c4, %c0_35, %c0_36] : memref<9x4x4xbf16, #tpu.memory_space<vmem>>, vector<1x4x4xbf16>
    %44 = vector.shape_cast %43 : vector<1x4x4xbf16> to vector<4x4xbf16>
    %cst_37 = arith.constant dense<0.000000e+00> : vector<224x4xf32>
    %45 = tpu.matmul %42, %44, %cst_37 {dimension_numbers = #tpu.dot_dimension_numbers<[1], [0], [0], [1], [0, 0, 1, 1], [], []>} : vector<224x4xbf16>, vector<4x4xbf16>, vector<224x4xf32> -> vector<224x4xf32>
    %46 = arith.addf %40, %45 : vector<224x4xf32>
    %c18 = arith.constant 18 : index
    %c0_38 = arith.constant 0 : index
    %47 = vector.load %arg12[%c18, %c0_38] : memref<264x4xf32, #tpu.memory_space<vmem>>, vector<224x4xf32>
    %48 = arith.truncf %47 : vector<224x4xf32> to vector<224x4xbf16>
    %c5 = arith.constant 5 : index
    %c0_39 = arith.constant 0 : index
    %c0_40 = arith.constant 0 : index
    %49 = vector.load %arg3[%c5, %c0_39, %c0_40] : memref<9x4x4xbf16, #tpu.memory_space<vmem>>, vector<1x4x4xbf16>
    %50 = vector.shape_cast %49 : vector<1x4x4xbf16> to vector<4x4xbf16>
    %cst_41 = arith.constant dense<0.000000e+00> : vector<224x4xf32>
    %51 = tpu.matmul %48, %50, %cst_41 {dimension_numbers = #tpu.dot_dimension_numbers<[1], [0], [0], [1], [0, 0, 1, 1], [], []>} : vector<224x4xbf16>, vector<4x4xbf16>, vector<224x4xf32> -> vector<224x4xf32>
    %52 = arith.addf %46, %51 : vector<224x4xf32>
    %c32 = arith.constant 32 : index
    %c0_42 = arith.constant 0 : index
    %53 = vector.load %arg12[%c32, %c0_42] : memref<264x4xf32, #tpu.memory_space<vmem>>, vector<224x4xf32>
    %54 = arith.truncf %53 : vector<224x4xf32> to vector<224x4xbf16>
    %c6 = arith.constant 6 : index
    %c0_43 = arith.constant 0 : index
    %c0_44 = arith.constant 0 : index
    %55 = vector.load %arg3[%c6, %c0_43, %c0_44] : memref<9x4x4xbf16, #tpu.memory_space<vmem>>, vector<1x4x4xbf16>
    %56 = vector.shape_cast %55 : vector<1x4x4xbf16> to vector<4x4xbf16>
    %cst_45 = arith.constant dense<0.000000e+00> : vector<224x4xf32>
    %57 = tpu.matmul %54, %56, %cst_45 {dimension_numbers = #tpu.dot_dimension_numbers<[1], [0], [0], [1], [0, 0, 1, 1], [], []>} : vector<224x4xbf16>, vector<4x4xbf16>, vector<224x4xf32> -> vector<224x4xf32>
    %58 = arith.addf %52, %57 : vector<224x4xf32>
    %c33 = arith.constant 33 : index
    %c0_46 = arith.constant 0 : index
    %59 = vector.load %arg12[%c33, %c0_46] : memref<264x4xf32, #tpu.memory_space<vmem>>, vector<224x4xf32>
    %60 = arith.truncf %59 : vector<224x4xf32> to vector<224x4xbf16>
    %c7 = arith.constant 7 : index
    %c0_47 = arith.constant 0 : index
    %c0_48 = arith.constant 0 : index
    %61 = vector.load %arg3[%c7, %c0_47, %c0_48] : memref<9x4x4xbf16, #tpu.memory_space<vmem>>, vector<1x4x4xbf16>
    %62 = vector.shape_cast %61 : vector<1x4x4xbf16> to vector<4x4xbf16>
    %cst_49 = arith.constant dense<0.000000e+00> : vector<224x4xf32>
    %63 = tpu.matmul %60, %62, %cst_49 {dimension_numbers = #tpu.dot_dimension_numbers<[1], [0], [0], [1], [0, 0, 1, 1], [], []>} : vector<224x4xbf16>, vector<4x4xbf16>, vector<224x4xf32> -> vector<224x4xf32>
    %64 = arith.addf %58, %63 : vector<224x4xf32>
    %c34 = arith.constant 34 : index
    %c0_50 = arith.constant 0 : index
    %65 = vector.load %arg12[%c34, %c0_50] : memref<264x4xf32, #tpu.memory_space<vmem>>, vector<224x4xf32>
    %66 = arith.truncf %65 : vector<224x4xf32> to vector<224x4xbf16>
    %c8 = arith.constant 8 : index
    %c0_51 = arith.constant 0 : index
    %c0_52 = arith.constant 0 : index
    %67 = vector.load %arg3[%c8, %c0_51, %c0_52] : memref<9x4x4xbf16, #tpu.memory_space<vmem>>, vector<1x4x4xbf16>
    %68 = vector.shape_cast %67 : vector<1x4x4xbf16> to vector<4x4xbf16>
    %cst_53 = arith.constant dense<0.000000e+00> : vector<224x4xf32>
    %69 = tpu.matmul %66, %68, %cst_53 {dimension_numbers = #tpu.dot_dimension_numbers<[1], [0], [0], [1], [0, 0, 1, 1], [], []>} : vector<224x4xbf16>, vector<4x4xbf16>, vector<224x4xf32> -> vector<224x4xf32>
    %70 = arith.addf %64, %69 : vector<224x4xf32>
    %c0_54 = arith.constant 0 : index
    %c0_55 = arith.constant 0 : index
    %71 = vector.load %arg7[%c0_54, %c0_55] : memref<1x4xf32, #tpu.memory_space<vmem>>, vector<1x4xf32>
    %72 = vector.broadcast %71 : vector<1x4xf32> to vector<224x4xf32>
    %73 = arith.mulf %70, %72 : vector<224x4xf32>
    %c0_56 = arith.constant 0 : index
    %c0_57 = arith.constant 0 : index
    %74 = vector.load %arg8[%c0_56, %c0_57] : memref<1x4xf32, #tpu.memory_space<vmem>>, vector<1x4xf32>
    %75 = vector.broadcast %74 : vector<1x4xf32> to vector<224x4xf32>
    %76 = arith.addf %73, %75 : vector<224x4xf32>
    %cst_58 = arith.constant 0.000000e+00 : f32
    %77 = vector.broadcast %cst_58 : f32 to vector<224x4xf32>
    %78 = arith.maximumf %76, %77 : vector<224x4xf32>
    %79 = arith.truncf %78 : vector<224x4xf32> to vector<224x4xbf16>
    %c0_59 = arith.constant 0 : index
    %c0_60 = arith.constant 0 : index
    %80 = vector.load %arg4[%c0_59, %c0_60] : memref<4x16xbf16, #tpu.memory_space<vmem>>, vector<4x16xbf16>
    %cst_61 = arith.constant dense<0.000000e+00> : vector<224x16xf32>
    %81 = tpu.matmul %79, %80, %cst_61 {dimension_numbers = #tpu.dot_dimension_numbers<[1], [0], [0], [1], [0, 0, 1, 1], [], []>} : vector<224x4xbf16>, vector<4x16xbf16>, vector<224x16xf32> -> vector<224x16xf32>
    %c0_62 = arith.constant 0 : index
    %c0_63 = arith.constant 0 : index
    %82 = vector.load %arg9[%c0_62, %c0_63] : memref<1x16xf32, #tpu.memory_space<vmem>>, vector<1x16xf32>
    %83 = vector.broadcast %82 : vector<1x16xf32> to vector<224x16xf32>
    %84 = arith.mulf %81, %83 : vector<224x16xf32>
    %c0_64 = arith.constant 0 : index
    %c0_65 = arith.constant 0 : index
    %85 = vector.load %arg10[%c0_64, %c0_65] : memref<1x16xf32, #tpu.memory_space<vmem>>, vector<1x16xf32>
    %86 = vector.broadcast %85 : vector<1x16xf32> to vector<224x16xf32>
    %87 = arith.addf %84, %86 : vector<224x16xf32>
    %c0_66 = arith.constant 0 : index
    %c17_67 = arith.constant 17 : index
    %c0_68 = arith.constant 0 : index
    %88 = vector.load %arg1[%c0_66, %c17_67, %c0_68] : memref<1x256x16xf32, #tpu.memory_space<vmem>>, vector<1x224x16xf32>
    %89 = vector.shape_cast %88 : vector<1x224x16xf32> to vector<224x16xf32>
    %90 = arith.addf %87, %89 : vector<224x16xf32>
    %cst_69 = arith.constant 0.000000e+00 : f32
    %91 = vector.broadcast %cst_69 : f32 to vector<224x16xf32>
    %92 = arith.maximumf %90, %91 : vector<224x16xf32>
    %c0_70 = arith.constant 0 : index
    %c0_71 = arith.constant 0 : index
    %c0_72 = arith.constant 0 : index
    %93 = vector.load %arg11[%c0_70, %c0_71, %c0_72] : memref<1x224x16xf32, #tpu.memory_space<vmem>>, vector<1x224x16xf32>
    %94 = vector.shape_cast %93 : vector<1x224x16xf32> to vector<224x16xf32>
    %95 = vector.shape_cast %92 : vector<224x16xf32> to vector<1x224x16xf32>
    tpu.vector_store %arg11[%c0_70, %c0_71, %c0_72], %95 {strides = array<i32>} : memref<1x224x16xf32, #tpu.memory_space<vmem>>, vector<1x224x16xf32>,
    return
  }
  func.func @transform_0(%arg0: i32) -> (i32, i32, i32) {
    %c0_i32 = arith.constant 0 : i32
    %c0_i32_0 = arith.constant 0 : i32
    %c0_i32_1 = arith.constant 0 : i32
    return %arg0, %c0_i32, %c0_i32_0 : i32, i32, i32
  }
  func.func @transform_1(%arg0: i32) -> (i32, i32) {
    %c0_i32 = arith.constant 0 : i32
    %c0_i32_0 = arith.constant 0 : i32
    %c0_i32_1 = arith.constant 0 : i32
    return %c0_i32, %c0_i32_0 : i32, i32
  }
  func.func @transform_2(%arg0: i32) -> (i32, i32, i32) {
    %c0_i32 = arith.constant 0 : i32
    %c0_i32_0 = arith.constant 0 : i32
    %c0_i32_1 = arith.constant 0 : i32
    %c0_i32_2 = arith.constant 0 : i32
    return %c0_i32, %c0_i32_0, %c0_i32_1 : i32, i32, i32
  }
  func.func @transform_3(%arg0: i32) -> (i32, i32) {
    %c0_i32 = arith.constant 0 : i32
    %c0_i32_0 = arith.constant 0 : i32
    %c0_i32_1 = arith.constant 0 : i32
    return %c0_i32, %c0_i32_0 : i32, i32
  }
  func.func @transform_4(%arg0: i32) -> (i32, i32) {
    %c0_i32 = arith.constant 0 : i32
    %c0_i32_0 = arith.constant 0 : i32
    %c0_i32_1 = arith.constant 0 : i32
    return %c0_i32, %c0_i32_0 : i32, i32
  }
  func.func @transform_5(%arg0: i32) -> (i32, i32) {
    %c0_i32 = arith.constant 0 : i32
    %c0_i32_0 = arith.constant 0 : i32
    %c0_i32_1 = arith.constant 0 : i32
    return %c0_i32, %c0_i32_0 : i32, i32
  }
  func.func @transform_6(%arg0: i32) -> (i32, i32) {
    %c0_i32 = arith.constant 0 : i32
    %c0_i32_0 = arith.constant 0 : i32
    %c0_i32_1 = arith.constant 0 : i32
    return %c0_i32, %c0_i32_0 : i32, i32
  }
  func.func @transform_7(%arg0: i32) -> (i32, i32) {
    %c0_i32 = arith.constant 0 : i32
    %c0_i32_0 = arith.constant 0 : i32
    %c0_i32_1 = arith.constant 0 : i32
    return %c0_i32, %c0_i32_0 : i32, i32
  }
  func.func @transform_8(%arg0: i32) -> (i32, i32) {
    %c0_i32 = arith.constant 0 : i32
    %c0_i32_0 = arith.constant 0 : i32
    %c0_i32_1 = arith.constant 0 : i32
    return %c0_i32, %c0_i32_0 : i32, i32
  }
  func.func @transform_9(%arg0: i32) -> (i32, i32) {
    %c0_i32 = arith.constant 0 : i32
    %c0_i32_0 = arith.constant 0 : i32
    %c0_i32_1 = arith.constant 0 : i32
    return %c0_i32, %c0_i32_0 : i32, i32
  }
  func.func @transform_10(%arg0: i32) -> (i32, i32, i32) {
    %c0_i32 = arith.constant 0 : i32
    %c0_i32_0 = arith.constant 0 : i32
    %c0_i32_1 = arith.constant 0 : i32
    return %arg0, %c0_i32, %c0_i32_0 : i32, i32, i32
  }
}

</mosaic_0001>

<llo_original>
// kernel: tpu_custom_call.1
$region0: #{tpu_custom_call.1}
  #allocation0 [shape = 'u32[]', space=smem, size = 0x4, offset = 0x4, fixed_abs, tag = 'smem constant byte address 0x4 - core index']
  #allocation1 [shape = 'u32[72,128]{1,0:T(1,128)}', space=vmem, size = 0x9000, scoped, tag = 'internal scratch']
  #allocation2 [shape = 'f32[264,4]{1,0:T(8,128)}', space=vmem, size = 0x21000, scoped, tag = 'scratch operand']
  %s0 = inlined_call_operand.vmem [shape: f32[2,256,16], index: 0, kind: input, shape index: {}]
  %s1 = inlined_call_operand.vmem [shape: bf16[16,4], index: 1, kind: input, shape index: {}]
  %s2 = inlined_call_operand.vmem [shape: bf16[9,4,4], index: 2, kind: input, shape index: {}]
  %s3 = inlined_call_operand.vmem [shape: bf16[4,16], index: 3, kind: input, shape index: {}]
  %s4 = inlined_call_operand.vmem [shape: f32[1,4], index: 4, kind: input, shape index: {}]
  %s5 = inlined_call_operand.vmem [shape: f32[1,4], index: 5, kind: input, shape index: {}]
  %s6 = inlined_call_operand.vmem [shape: f32[1,4], index: 6, kind: input, shape index: {}]
  %s7 = inlined_call_operand.vmem [shape: f32[1,4], index: 7, kind: input, shape index: {}]
  %s8 = inlined_call_operand.vmem [shape: f32[1,16], index: 8, kind: input, shape index: {}]
  %s9 = inlined_call_operand.vmem [shape: f32[1,16], index: 9, kind: input, shape index: {}]
  %s10 = inlined_call_operand.vmem [shape: f32[2,224,16], index: 10, kind: output, shape index: {}]
  %s11 = sld [smem:[#allocation0]]
  $region73: #{tpu_custom_call.1} parent=0
    _
  %s13 = ssub.s32 1, %s11
  %s14 = scalar_select 0, %s13, %s11
  loop: start=0, step=1, limit=4
  $region2: #{tpu_custom_call.1} parent=0 // loop_pre_header
    _
  $region3: #{tpu_custom_call.1} parent=0 // loop_header
    %s16 = sphi 0, %s20
    %p17 = scmp.ge.s32.totalorder %s16, 4
    %s26 = sphi 0, %s28
    %s29 = sphi 0, %s26
    %s30 = sphi 0, %s29
    %s46 = sphi 0, %s30
    %s50 = sphi 0, %s50
    %s52 = sphi 0, %s50
    %s53 = sphi 0, %s52
    %s67 = sphi 0, %s53
    %s71 = sphi 0, %s71
    %s73 = sphi 0, %s71
    %s74 = sphi 0, %s73
    %s88 = sphi 0, %s74
    %s92 = sphi 0, %s92
    %s94 = sphi 0, %s92
    %s95 = sphi 0, %s94
    %s109 = sphi 0, %s95
    %s113 = sphi 0, %s113
    %s115 = sphi 0, %s113
    %s116 = sphi 0, %s115
    %s130 = sphi 0, %s116
    %s134 = sphi 0, %s134
    %s136 = sphi 0, %s134
    %s137 = sphi 0, %s136
    %s151 = sphi 0, %s137
    %s155 = sphi 0, %s155
    %s157 = sphi 0, %s155
    %s158 = sphi 0, %s157
    %s172 = sphi 0, %s158
    %s176 = sphi 0, %s176
    %s178 = sphi 0, %s176
    %s179 = sphi 0, %s178
    %s193 = sphi 0, %s179
    %s197 = sphi 0, %s197
    %s199 = sphi 0, %s197
    %s200 = sphi 0, %s199
    %s214 = sphi 0, %s200
    %s218 = sphi 0, %s218
    %s220 = sphi 0, %s218
    %s221 = sphi 0, %s220
    %s235 = sphi 0, %s221
    %s241 = sphi 0, %s243
    %s244 = sphi 0, %s241
    %s245 = sphi 0, %s244
    %s261 = sphi 0, %s245
  $region4: #{tpu_custom_call.1} parent=0 // loop_header_branch
    %19 = sbr.rel (%p17) target = $region8
  $region5: #{tpu_custom_call.1} parent=0 // loop_body
    %s21 = ssub.s32 %s16, 1
    %s22 = ssub.s32 %s16, 2
    %s23 = sadd.s32 %s16, 1
    %s24 = ssub.s32 %s16, %s23
    %p25 = scmp.eq.s32.totalorder %s24, 0
    %s27 = sadd.s32 %s26, 1
    %s28 = scalar_select %p25, %s26, %s27
    %p31 = pneg %p25
    %p32 = scmp.eq.s32.totalorder %s16, 1
    %p33 = por %p31, %p32
    %p34 = scmp.ne.s32.totalorder %s26, %s29
    %p35 = scmp.eq.s32.totalorder %s16, 0
    %p36 = por %p34, %p35
    %p37 = scmp.ne.s32.totalorder %s26, %s29
    %p38 = scmp.eq.s32.totalorder %s21, 1
    %p39 = por %p37, %p38
    %p40 = scmp.ne.s32.totalorder %s29, %s30
    %p41 = scmp.eq.s32.totalorder %s21, 0
    %p42 = por %p40, %p41
    %p43 = scmp.ne.s32.totalorder %s29, %s30
    %p44 = scmp.eq.s32.totalorder %s22, 1
    %p45 = por %p43, %p44
    %p47 = scmp.ne.s32.totalorder %s30, %s46
    %p48 = scmp.eq.s32.totalorder %s22, 0
    %p49 = por %p47, %p48
    %s51 = sadd.s32 %s50, 1
    %p54 = scmp.eq.s32.totalorder %s16, 1
    %p55 = scmp.ne.s32.totalorder %s50, %s52
    %p56 = scmp.eq.s32.totalorder %s16, 0
    %p57 = por %p55, %p56
    %p58 = scmp.ne.s32.totalorder %s50, %s52
    %p59 = scmp.eq.s32.totalorder %s21, 1
    %p60 = por %p58, %p59
    %p61 = scmp.ne.s32.totalorder %s52, %s53
    %p62 = scmp.eq.s32.totalorder %s21, 0
    %p63 = por %p61, %p62
    %p64 = scmp.ne.s32.totalorder %s52, %s53
    %p65 = scmp.eq.s32.totalorder %s22, 1
    %p66 = por %p64, %p65
    %p68 = scmp.ne.s32.totalorder %s53, %s67
    %p69 = scmp.eq.s32.totalorder %s22, 0
    %p70 = por %p68, %p69
    %s72 = sadd.s32 %s71, 1
    %p75 = scmp.eq.s32.totalorder %s16, 1
    %p76 = scmp.ne.s32.totalorder %s71, %s73
    %p77 = scmp.eq.s32.totalorder %s16, 0
    %p78 = por %p76, %p77
    %p79 = scmp.ne.s32.totalorder %s71, %s73
    %p80 = scmp.eq.s32.totalorder %s21, 1
    %p81 = por %p79, %p80
    %p82 = scmp.ne.s32.totalorder %s73, %s74
    %p83 = scmp.eq.s32.totalorder %s21, 0
    %p84 = por %p82, %p83
    %p85 = scmp.ne.s32.totalorder %s73, %s74
    %p86 = scmp.eq.s32.totalorder %s22, 1
    %p87 = por %p85, %p86
    %p89 = scmp.ne.s32.totalorder %s74, %s88
    %p90 = scmp.eq.s32.totalorder %s22, 0
    %p91 = por %p89, %p90
    %s93 = sadd.s32 %s92, 1
    %p96 = scmp.eq.s32.totalorder %s16, 1
    %p97 = scmp.ne.s32.totalorder %s92, %s94
    %p98 = scmp.eq.s32.totalorder %s16, 0
    %p99 = por %p97, %p98
    %p100 = scmp.ne.s32.totalorder %s92, %s94
    %p101 = scmp.eq.s32.totalorder %s21, 1
    %p102 = por %p100, %p101
    %p103 = scmp.ne.s32.totalorder %s94, %s95
    %p104 = scmp.eq.s32.totalorder %s21, 0
    %p105 = por %p103, %p104
    %p106 = scmp.ne.s32.totalorder %s94, %s95
    %p107 = scmp.eq.s32.totalorder %s22, 1
    %p108 = por %p106, %p107
    %p110 = scmp.ne.s32.totalorder %s95, %s109
    %p111 = scmp.eq.s32.totalorder %s22, 0
    %p112 = por %p110, %p111
    %s114 = sadd.s32 %s113, 1
    %p117 = scmp.eq.s32.totalorder %s16, 1
    %p118 = scmp.ne.s32.totalorder %s113, %s115
    %p119 = scmp.eq.s32.totalorder %s16, 0
    %p120 = por %p118, %p119
    %p121 = scmp.ne.s32.totalorder %s113, %s115
    %p122 = scmp.eq.s32.totalorder %s21, 1
    %p123 = por %p121, %p122
    %p124 = scmp.ne.s32.totalorder %s115, %s116
    %p125 = scmp.eq.s32.totalorder %s21, 0
    %p126 = por %p124, %p125
    %p127 = scmp.ne.s32.totalorder %s115, %s116
    %p128 = scmp.eq.s32.totalorder %s22, 1
    %p129 = por %p127, %p128
    %p131 = scmp.ne.s32.totalorder %s116, %s130
    %p132 = scmp.eq.s32.totalorder %s22, 0
    %p133 = por %p131, %p132
    %s135 = sadd.s32 %s134, 1
    %p138 = scmp.eq.s32.totalorder %s16, 1
    %p139 = scmp.ne.s32.totalorder %s134, %s136
    %p140 = scmp.eq.s32.totalorder %s16, 0
    %p141 = por %p139, %p140
    %p142 = scmp.ne.s32.totalorder %s134, %s136
    %p143 = scmp.eq.s32.totalorder %s21, 1
    %p144 = por %p142, %p143
    %p145 = scmp.ne.s32.totalorder %s136, %s137
    %p146 = scmp.eq.s32.totalorder %s21, 0
    %p147 = por %p145, %p146
    %p148 = scmp.ne.s32.totalorder %s136, %s137
    %p149 = scmp.eq.s32.totalorder %s22, 1
    %p150 = por %p148, %p149
    %p152 = scmp.ne.s32.totalorder %s137, %s151
    %p153 = scmp.eq.s32.totalorder %s22, 0
    %p154 = por %p152, %p153
    %s156 = sadd.s32 %s155, 1
    %p159 = scmp.eq.s32.totalorder %s16, 1
    %p160 = scmp.ne.s32.totalorder %s155, %s157
    %p161 = scmp.eq.s32.totalorder %s16, 0
    %p162 = por %p160, %p161
    %p163 = scmp.ne.s32.totalorder %s155, %s157
    %p164 = scmp.eq.s32.totalorder %s21, 1
    %p165 = por %p163, %p164
    %p166 = scmp.ne.s32.totalorder %s157, %s158
    %p167 = scmp.eq.s32.totalorder %s21, 0
    %p168 = por %p166, %p167
    %p169 = scmp.ne.s32.totalorder %s157, %s158
    %p170 = scmp.eq.s32.totalorder %s22, 1
    %p171 = por %p169, %p170
    %p173 = scmp.ne.s32.totalorder %s158, %s172
    %p174 = scmp.eq.s32.totalorder %s22, 0
    %p175 = por %p173, %p174
    %s177 = sadd.s32 %s176, 1
    %p180 = scmp.eq.s32.totalorder %s16, 1
    %p181 = scmp.ne.s32.totalorder %s176, %s178
    %p182 = scmp.eq.s32.totalorder %s16, 0
    %p183 = por %p181, %p182
    %p184 = scmp.ne.s32.totalorder %s176, %s178
    %p185 = scmp.eq.s32.totalorder %s21, 1
    %p186 = por %p184, %p185
    %p187 = scmp.ne.s32.totalorder %s178, %s179
    %p188 = scmp.eq.s32.totalorder %s21, 0
    %p189 = por %p187, %p188
    %p190 = scmp.ne.s32.totalorder %s178, %s179
    %p191 = scmp.eq.s32.totalorder %s22, 1
    %p192 = por %p190, %p191
    %p194 = scmp.ne.s32.totalorder %s179, %s193
    %p195 = scmp.eq.s32.totalorder %s22, 0
    %p196 = por %p194, %p195
    %s198 = sadd.s32 %s197, 1
    %p201 = scmp.eq.s32.totalorder %s16, 1
    %p202 = scmp.ne.s32.totalorder %s197, %s199
    %p203 = scmp.eq.s32.totalorder %s16, 0
    %p204 = por %p202, %p203
    %p205 = scmp.ne.s32.totalorder %s197, %s199
    %p206 = scmp.eq.s32.totalorder %s21, 1
    %p207 = por %p205, %p206
    %p208 = scmp.ne.s32.totalorder %s199, %s200
    %p209 = scmp.eq.s32.totalorder %s21, 0
    %p210 = por %p208, %p209
    %p211 = scmp.ne.s32.totalorder %s199, %s200
    %p212 = scmp.eq.s32.totalorder %s22, 1
    %p213 = por %p211, %p212
    %p215 = scmp.ne.s32.totalorder %s200, %s214
    %p216 = scmp.eq.s32.totalorder %s22, 0
    %p217 = por %p215, %p216
    %s219 = sadd.s32 %s218, 1
    %p222 = scmp.eq.s32.totalorder %s16, 1
    %p223 = scmp.ne.s32.totalorder %s218, %s220
    %p224 = scmp.eq.s32.totalorder %s16, 0
    %p225 = por %p223, %p224
    %p226 = scmp.ne.s32.totalorder %s218, %s220
    %p227 = scmp.eq.s32.totalorder %s21, 1
    %p228 = por %p226, %p227
    %p229 = scmp.ne.s32.totalorder %s220, %s221
    %p230 = scmp.eq.s32.totalorder %s21, 0
    %p231 = por %p229, %p230
    %p232 = scmp.ne.s32.totalorder %s220, %s221
    %p233 = scmp.eq.s32.totalorder %s22, 1
    %p234 = por %p232, %p233
    %p236 = scmp.ne.s32.totalorder %s221, %s235
    %p237 = scmp.eq.s32.totalorder %s22, 0
    %p238 = por %p236, %p237
    %s239 = ssub.s32 %s16, %s23
    %p240 = scmp.eq.s32.totalorder %s239, 0
    %s242 = sadd.s32 %s241, 1
    %s243 = scalar_select %p240, %s241, %s242
    %p246 = pneg %p240
    %p247 = scmp.eq.s32.totalorder %s16, 1
    %p248 = por %p246, %p247
    %p249 = scmp.ne.s32.totalorder %s241, %s244
    %p250 = scmp.eq.s32.totalorder %s16, 0
    %p251 = por %p249, %p250
    %p252 = scmp.ne.s32.totalorder %s241, %s244
    %p253 = scmp.eq.s32.totalorder %s21, 1
    %p254 = por %p252, %p253
    %p255 = scmp.ne.s32.totalorder %s244, %s245
    %p256 = scmp.eq.s32.totalorder %s21, 0
    %p257 = por %p255, %p256
    %p258 = scmp.ne.s32.totalorder %s244, %s245
    %p259 = scmp.eq.s32.totalorder %s22, 1
    %p260 = por %p258, %p259
    %p262 = scmp.ne.s32.totalorder %s245, %s261
    %p263 = scmp.eq.s32.totalorder %s22, 0
    %p264 = por %p262, %p263
    %p265 = scmp.le.s32.totalorder 1, %s16
    %p266 = scmp.lt.s32.totalorder %s16, 3
    %p267 = pnand %p265, %p266
    %p268 = pneg %p267
    // Predicated region
    $region9: #{tpu_custom_call.1} parent=5 // pred_check
      _
    $region10: #{tpu_custom_call.1} parent=5 // pred_check_branch
      %270 = sbr.rel (%p267) target = $region12
    $region11: #{tpu_custom_call.1} parent=5 // pred_region
      %s271 = ssub.s32 %s16, 1
      // Predicated region
      $region13: #{tpu_custom_call.1} parent=11 // pred_check
        %p272 = pneg %p63
      $region14: #{tpu_custom_call.1} parent=11 // pred_check_branch
        %274 = sbr.rel (%p272) target = $region16
      $region15: #{tpu_custom_call.1} parent=11 // pred_region
        _
      $region16: #{tpu_custom_call.1} parent=11 // pred_fallthru
        _
      // Predicated region
      $region17: #{tpu_custom_call.1} parent=11 // pred_check
        %p275 = pneg %p84
      $region18: #{tpu_custom_call.1} parent=11 // pred_check_branch
        %277 = sbr.rel (%p275) target = $region20
      $region19: #{tpu_custom_call.1} parent=11 // pred_region
        _
      $region20: #{tpu_custom_call.1} parent=11 // pred_fallthru
        _
      // Predicated region
      $region21: #{tpu_custom_call.1} parent=11 // pred_check
        %p278 = pneg %p105
      $region22: #{tpu_custom_call.1} parent=11 // pred_check_branch
        %280 = sbr.rel (%p278) target = $region24
      $region23: #{tpu_custom_call.1} parent=11 // pred_region
        _
      $region24: #{tpu_custom_call.1} parent=11 // pred_fallthru
        _
      // Predicated region
      $region25: #{tpu_custom_call.1} parent=11 // pred_check
        %p281 = pneg %p126
      $region26: #{tpu_custom_call.1} parent=11 // pred_check_branch
        %283 = sbr.rel (%p281) target = $region28
      $region27: #{tpu_custom_call.1} parent=11 // pred_region
        _
      $region28: #{tpu_custom_call.1} parent=11 // pred_fallthru
        _
      // Predicated region
      $region29: #{tpu_custom_call.1} parent=11 // pred_check
        %p284 = pneg %p147
      $region30: #{tpu_custom_call.1} parent=11 // pred_check_branch
        %286 = sbr.rel (%p284) target = $region32
      $region31: #{tpu_custom_call.1} parent=11 // pred_region
        _
      $region32: #{tpu_custom_call.1} parent=11 // pred_fallthru
        _
      // Predicated region
      $region33: #{tpu_custom_call.1} parent=11 // pred_check
        %p287 = pneg %p168
      $region34: #{tpu_custom_call.1} parent=11 // pred_check_branch
        %289 = sbr.rel (%p287) target = $region36
      $region35: #{tpu_custom_call.1} parent=11 // pred_region
        _
      $region36: #{tpu_custom_call.1} parent=11 // pred_fallthru
        _
      // Predicated region
      $region37: #{tpu_custom_call.1} parent=11 // pred_check
        %p290 = pneg %p189
      $region38: #{tpu_custom_call.1} parent=11 // pred_check_branch
        %292 = sbr.rel (%p290) target = $region40
      $region39: #{tpu_custom_call.1} parent=11 // pred_region
        _
      $region40: #{tpu_custom_call.1} parent=11 // pred_fallthru
        _
      // Predicated region
      $region41: #{tpu_custom_call.1} parent=11 // pred_check
        %p293 = pneg %p210
      $region42: #{tpu_custom_call.1} parent=11 // pred_check_branch
        %295 = sbr.rel (%p293) target = $region44
      $region43: #{tpu_custom_call.1} parent=11 // pred_region
        _
      $region44: #{tpu_custom_call.1} parent=11 // pred_fallthru
        _
      // Predicated region
      $region45: #{tpu_custom_call.1} parent=11 // pred_check
        %p296 = pneg %p231
      $region46: #{tpu_custom_call.1} parent=11 // pred_check_branch
        %298 = sbr.rel (%p296) target = $region48
      $region47: #{tpu_custom_call.1} parent=11 // pred_region
        _
      $region48: #{tpu_custom_call.1} parent=11 // pred_fallthru
        _
    $region12: #{tpu_custom_call.1} parent=5 // pred_fallthru
      _
    %p299 = scmp.lt.s32.totalorder %s16, 2
    // Predicated region
    $region49: #{tpu_custom_call.1} parent=5 // pred_check
      %p300 = pneg %p299
    $region50: #{tpu_custom_call.1} parent=5 // pred_check_branch
      %302 = sbr.rel (%p300) target = $region52
    $region51: #{tpu_custom_call.1} parent=5 // pred_region
      // Predicated region
      $region53: #{tpu_custom_call.1} parent=51 // pred_check
        %p303 = pneg %p36
      $region54: #{tpu_custom_call.1} parent=51 // pred_check_branch
        %305 = sbr.rel (%p303) target = $region56
      $region55: #{tpu_custom_call.1} parent=51 // pred_region
        %p306 = scmp.lt.s32.totalorder %s16, 1
        %s307 = scalar_select %p306, %s16, 1
        %s308 = smul.addr %s307, 32
        %s309 = smul.addr %s308, 8
        %s310 = scalar_lea.vmem %s0, %s309
      $region56: #{tpu_custom_call.1} parent=51 // pred_fallthru
        _
    $region52: #{tpu_custom_call.1} parent=5 // pred_fallthru
      _
    %p311 = scmp.le.s32.totalorder 1, %s16
    %p312 = scmp.lt.s32.totalorder %s16, 3
    %p313 = pnand %p311, %p312
    %p314 = pneg %p313
    // Predicated region
    $region57: #{tpu_custom_call.1} parent=5 // pred_check
      _
    $region58: #{tpu_custom_call.1} parent=5 // pred_check_branch
      %316 = sbr.rel (%p313) target = $region60
    $region59: #{tpu_custom_call.1} parent=5 // pred_region
      %s317 = ssub.s32 %s16, 1
      %p318 = scmp.lt.s32.totalorder %s21, 1
      %s319 = scalar_select %p318, %s21, 1
      %s320 = smul.addr %s319, 32
      %s321 = smul.addr %s320, 8
      %s322 = scalar_lea.vmem %s0, %s321
      %p323 = pneg %p42
      %p324 = pneg %p39
      %p325 = pneg %p63
      %p326 = pneg %p60
      %p327 = pneg %p84
      %p328 = pneg %p81
      %p329 = pneg %p105
      %p330 = pneg %p102
      %p331 = pneg %p126
      %p332 = pneg %p123
      %p333 = pneg %p147
      %p334 = pneg %p144
      %p335 = pneg %p168
      %p336 = pneg %p165
      %p337 = pneg %p189
      %p338 = pneg %p186
      %p339 = pneg %p210
      %p340 = pneg %p207
      %p341 = pneg %p231
      %p342 = pneg %p228
      %p343 = pneg %p257
      %p344 = pneg %p254
      %p345 = scmp.lt.s32.totalorder %s21, 1
      %s346 = scalar_select %p345, %s21, 1
      %s347 = smul.addr %s346, 28
      %s348 = smul.addr %s347, 8
      %s349 = scalar_lea.vmem %s10, %s348
      %p350 = scmp.lt.s32.totalorder %s21, 1
      %s351 = scalar_select %p350, %s21, 1
      %s352 = smul.addr %s351, 32
      %s353 = smul.addr %s352, 8
      %s354 = scalar_lea.vmem %s0, %s353
      %p355 = scmp.lt.s32.totalorder %s21, 1
      %s356 = scalar_select %p355, %s21, 1
      %s357 = smul.addr %s356, 28
      %s358 = smul.addr %s357, 8
      %s359 = scalar_lea.vmem %s10, %s358
      %v361 = vld [vmem:[%s354] sm:$0xff]
      %v362 = vld [vmem:[%s354 + $0x8] sm:$0xff]
      %v363 = vld [vmem:[%s354 + $0x10] sm:$0xff]
      %v364 = vld [vmem:[%s354 + $0x18] sm:$0xff]
      %v365 = vld [vmem:[%s354 + $0x20] sm:$0xff]
      %v366 = vld [vmem:[%s354 + $0x28] sm:$0xff]
      %v367 = vld [vmem:[%s354 + $0x30] sm:$0xff]
      %v368 = vld [vmem:[%s354 + $0x38] sm:$0xff]
      %v369 = vld [vmem:[%s354 + $0x40] sm:$0xff]
      %v370 = vld [vmem:[%s354 + $0x48] sm:$0xff]
      %v371 = vld [vmem:[%s354 + $0x50] sm:$0xff]
      %v372 = vld [vmem:[%s354 + $0x58] sm:$0xff]
      %v373 = vld [vmem:[%s354 + $0x60] sm:$0xff]
      %v374 = vld [vmem:[%s354 + $0x68] sm:$0xff]
      %v375 = vld [vmem:[%s354 + $0x70] sm:$0xff]
      %v376 = vld [vmem:[%s354 + $0x78] sm:$0xff]
      %v377 = vld [vmem:[%s354 + $0x80] sm:$0xff]
      %v378 = vld [vmem:[%s354 + $0x88] sm:$0xff]
      %v379 = vld [vmem:[%s354 + $0x90] sm:$0xff]
      %v380 = vld [vmem:[%s354 + $0x98] sm:$0xff]
      %v381 = vld [vmem:[%s354 + $0xa0] sm:$0xff]
      %v382 = vld [vmem:[%s354 + $0xa8] sm:$0xff]
      %v383 = vld [vmem:[%s354 + $0xb0] sm:$0xff]
      %v384 = vld [vmem:[%s354 + $0xb8] sm:$0xff]
      %v385 = vld [vmem:[%s354 + $0xc0] sm:$0xff]
      %v386 = vld [vmem:[%s354 + $0xc8] sm:$0xff]
      %v387 = vld [vmem:[%s354 + $0xd0] sm:$0xff]
      %v388 = vld [vmem:[%s354 + $0xd8] sm:$0xff]
      %v389 = vld [vmem:[%s354 + $0xe0] sm:$0xff]
      %v390 = vld [vmem:[%s354 + $0xe8] sm:$0xff]
      %v391 = vld [vmem:[%s354 + $0xf0] sm:$0xff]
      %v392 = vld [vmem:[%s354 + $0xf8] sm:$0xff]
      %v393 = vpack.c.bf16 %v362, %v361
      %v394 = vpack.c.bf16 %v364, %v363
      %v395 = vpack.c.bf16 %v366, %v365
      %v396 = vpack.c.bf16 %v368, %v367
      %v397 = vpack.c.bf16 %v370, %v369
      %v398 = vpack.c.bf16 %v372, %v371
      %v399 = vpack.c.bf16 %v374, %v373
      %v400 = vpack.c.bf16 %v376, %v375
      %v401 = vpack.c.bf16 %v378, %v377
      %v402 = vpack.c.bf16 %v380, %v379
      %v403 = vpack.c.bf16 %v382, %v381
      %v404 = vpack.c.bf16 %v384, %v383
      %v405 = vpack.c.bf16 %v386, %v385
      %v406 = vpack.c.bf16 %v388, %v387
      %v407 = vpack.c.bf16 %v390, %v389
      %v408 = vpack.c.bf16 %v392, %v391
      %v409 = vld [vmem:[%s1] sm:$0xf]
      %v410 = vld [vmem:[%s1 + $0x4] sm:$0xf]
      %v413 = vunpack.c.l.b16 %v409
      %v414 = vunpack.c.l.b16 %v410
      %v415 = vpack.c.b16 %v414, %v413
      %vm417 = vcmask 130048
      %v419 = vsel %vm417, %v393, 0
      %v422 = vsel %vm417, %v394, 0
      %v425 = vsel %vm417, %v395, 0
      %v428 = vsel %vm417, %v396, 0
      %v431 = vsel %vm417, %v397, 0
      %v434 = vsel %vm417, %v398, 0
      %v437 = vsel %vm417, %v399, 0
      %v440 = vsel %vm417, %v400, 0
      %v443 = vsel %vm417, %v401, 0
      %v446 = vsel %vm417, %v402, 0
      %v449 = vsel %vm417, %v403, 0
      %v452 = vsel %vm417, %v404, 0
      %v455 = vsel %vm417, %v405, 0
      %v458 = vsel %vm417, %v406, 0
      %v461 = vsel %vm417, %v407, 0
      %v464 = vsel %vm417, %v408, 0
      %466 = vmatpush.bf16.msra.mxu0 0
      %467 = vmatpush.bf16.msra.mxu0 0
      %468 = vmatpush.bf16.msra.mxu0 0
      %469 = vmatpush.bf16.msra.mxu0 0
      %470 = vmatpush.bf16.msra.mxu0 0
      %471 = vmatpush.bf16.msra.mxu0 0
      %472 = vmatpush.bf16.msra.mxu0 0
      %473 = vmatpush.bf16.msra.mxu0 %v415
      %474 = vmatmul.bf16.gmra.mxu0 %v419
      %v475 = vpop.f32.mrf.mxu0
      %v476 = vadd.f32 0.0, %v475
      %v477 = vpop.f32.mrf.mxu0
      %v478 = vadd.f32 0.0, %v477
      %479 = vmatmul.bf16.gmra.mxu0 %v422
      %v480 = vpop.f32.mrf.mxu0
      %v481 = vadd.f32 0.0, %v480
      %v482 = vpop.f32.mrf.mxu0
      %v483 = vadd.f32 0.0, %v482
      %484 = vmatmul.bf16.gmra.mxu0 %v425
      %v485 = vpop.f32.mrf.mxu0
      %v486 = vadd.f32 0.0, %v485
      %v487 = vpop.f32.mrf.mxu0
      %v488 = vadd.f32 0.0, %v487
      %489 = vmatmul.bf16.gmra.mxu0 %v428
      %v490 = vpop.f32.mrf.mxu0
      %v491 = vadd.f32 0.0, %v490
      %v492 = vpop.f32.mrf.mxu0
      %v493 = vadd.f32 0.0, %v492
      %494 = vmatmul.bf16.gmra.mxu0 %v431
      %v495 = vpop.f32.mrf.mxu0
      %v496 = vadd.f32 0.0, %v495
      %v497 = vpop.f32.mrf.mxu0
      %v498 = vadd.f32 0.0, %v497
      %499 = vmatmul.bf16.gmra.mxu0 %v434
      %v500 = vpop.f32.mrf.mxu0
      %v501 = vadd.f32 0.0, %v500
      %v502 = vpop.f32.mrf.mxu0
      %v503 = vadd.f32 0.0, %v502
      %504 = vmatmul.bf16.gmra.mxu0 %v437
      %v505 = vpop.f32.mrf.mxu0
      %v506 = vadd.f32 0.0, %v505
      %v507 = vpop.f32.mrf.mxu0
      %v508 = vadd.f32 0.0, %v507
      %509 = vmatmul.bf16.gmra.mxu0 %v440
      %v510 = vpop.f32.mrf.mxu0
      %v511 = vadd.f32 0.0, %v510
      %v512 = vpop.f32.mrf.mxu0
      %v513 = vadd.f32 0.0, %v512
      %514 = vmatmul.bf16.gmra.mxu0 %v443
      %v515 = vpop.f32.mrf.mxu0
      %v516 = vadd.f32 0.0, %v515
      %v517 = vpop.f32.mrf.mxu0
      %v518 = vadd.f32 0.0, %v517
      %519 = vmatmul.bf16.gmra.mxu0 %v446
      %v520 = vpop.f32.mrf.mxu0
      %v521 = vadd.f32 0.0, %v520
      %v522 = vpop.f32.mrf.mxu0
      %v523 = vadd.f32 0.0, %v522
      %524 = vmatmul.bf16.gmra.mxu0 %v449
      %v525 = vpop.f32.mrf.mxu0
      %v526 = vadd.f32 0.0, %v525
      %v527 = vpop.f32.mrf.mxu0
      %v528 = vadd.f32 0.0, %v527
      %529 = vmatmul.bf16.gmra.mxu0 %v452
      %v530 = vpop.f32.mrf.mxu0
      %v531 = vadd.f32 0.0, %v530
      %v532 = vpop.f32.mrf.mxu0
      %v533 = vadd.f32 0.0, %v532
      %534 = vmatmul.bf16.gmra.mxu0 %v455
      %v535 = vpop.f32.mrf.mxu0
      %v536 = vadd.f32 0.0, %v535
      %v537 = vpop.f32.mrf.mxu0
      %v538 = vadd.f32 0.0, %v537
      %539 = vmatmul.bf16.gmra.mxu0 %v458
      %v540 = vpop.f32.mrf.mxu0
      %v541 = vadd.f32 0.0, %v540
      %v542 = vpop.f32.mrf.mxu0
      %v543 = vadd.f32 0.0, %v542
      %544 = vmatmul.bf16.gmra.mxu0 %v461
      %v545 = vpop.f32.mrf.mxu0
      %v546 = vadd.f32 0.0, %v545
      %v547 = vpop.f32.mrf.mxu0
      %v548 = vadd.f32 0.0, %v547
      %549 = vmatmul.bf16.gmra.mxu0 %v464
      %v550 = vpop.f32.mrf.mxu0
      %v551 = vadd.f32 0.0, %v550
      %v552 = vpop.f32.mrf.mxu0
      %v553 = vadd.f32 0.0, %v552
      %554 = vdwg.mxu0
      %v555 = vld [vmem:[%s4] sm:$0x1]
      %v557 = vperm.slane %v555, 0
      %v559 = vmul.f32 %v476, %v557
      %v560 = vmul.f32 %v478, %v557
      %v561 = vmul.f32 %v481, %v557
      %v562 = vmul.f32 %v483, %v557
      %v563 = vmul.f32 %v486, %v557
      %v564 = vmul.f32 %v488, %v557
      %v565 = vmul.f32 %v491, %v557
      %v566 = vmul.f32 %v493, %v557
      %v567 = vmul.f32 %v496, %v557
      %v568 = vmul.f32 %v498, %v557
      %v569 = vmul.f32 %v501, %v557
      %v570 = vmul.f32 %v503, %v557
      %v571 = vmul.f32 %v506, %v557
      %v572 = vmul.f32 %v508, %v557
      %v573 = vmul.f32 %v511, %v557
      %v574 = vmul.f32 %v513, %v557
      %v575 = vmul.f32 %v516, %v557
      %v576 = vmul.f32 %v518, %v557
      %v577 = vmul.f32 %v521, %v557
      %v578 = vmul.f32 %v523, %v557
      %v579 = vmul.f32 %v526, %v557
      %v580 = vmul.f32 %v528, %v557
      %v581 = vmul.f32 %v531, %v557
      %v582 = vmul.f32 %v533, %v557
      %v583 = vmul.f32 %v536, %v557
      %v584 = vmul.f32 %v538, %v557
      %v585 = vmul.f32 %v541, %v557
      %v586 = vmul.f32 %v543, %v557
      %v587 = vmul.f32 %v546, %v557
      %v588 = vmul.f32 %v548, %v557
      %v589 = vmul.f32 %v551, %v557
      %v590 = vmul.f32 %v553, %v557
      %v591 = vld [vmem:[%s5] sm:$0x1]
      %v593 = vperm.slane %v591, 0
      %v595 = vadd.f32 %v559, %v593
      %v596 = vadd.f32 %v560, %v593
      %v597 = vadd.f32 %v561, %v593
      %v598 = vadd.f32 %v562, %v593
      %v599 = vadd.f32 %v563, %v593
      %v600 = vadd.f32 %v564, %v593
      %v601 = vadd.f32 %v565, %v593
      %v602 = vadd.f32 %v566, %v593
      %v603 = vadd.f32 %v567, %v593
      %v604 = vadd.f32 %v568, %v593
      %v605 = vadd.f32 %v569, %v593
      %v606 = vadd.f32 %v570, %v593
      %v607 = vadd.f32 %v571, %v593
      %v608 = vadd.f32 %v572, %v593
      %v609 = vadd.f32 %v573, %v593
      %v610 = vadd.f32 %v574, %v593
      %v611 = vadd.f32 %v575, %v593
      %v612 = vadd.f32 %v576, %v593
      %v613 = vadd.f32 %v577, %v593
      %v614 = vadd.f32 %v578, %v593
      %v615 = vadd.f32 %v579, %v593
      %v616 = vadd.f32 %v580, %v593
      %v617 = vadd.f32 %v581, %v593
      %v618 = vadd.f32 %v582, %v593
      %v619 = vadd.f32 %v583, %v593
      %v620 = vadd.f32 %v584, %v593
      %v621 = vadd.f32 %v585, %v593
      %v622 = vadd.f32 %v586, %v593
      %v623 = vadd.f32 %v587, %v593
      %v624 = vadd.f32 %v588, %v593
      %v625 = vadd.f32 %v589, %v593
      %v626 = vadd.f32 %v590, %v593
      %v627 = vmax.f32 %v595, 0.0
      %v628 = vmax.f32 %v596, 0.0
      %v629 = vmax.f32 %v597, 0.0
      %v630 = vmax.f32 %v598, 0.0
      %v631 = vmax.f32 %v599, 0.0
      %v632 = vmax.f32 %v600, 0.0
      %v633 = vmax.f32 %v601, 0.0
      %v634 = vmax.f32 %v602, 0.0
      %v635 = vmax.f32 %v603, 0.0
      %v636 = vmax.f32 %v604, 0.0
      %v637 = vmax.f32 %v605, 0.0
      %v638 = vmax.f32 %v606, 0.0
      %v639 = vmax.f32 %v607, 0.0
      %v640 = vmax.f32 %v608, 0.0
      %v641 = vmax.f32 %v609, 0.0
      %v642 = vmax.f32 %v610, 0.0
      %v643 = vmax.f32 %v611, 0.0
      %v644 = vmax.f32 %v612, 0.0
      %v645 = vmax.f32 %v613, 0.0
      %v646 = vmax.f32 %v614, 0.0
      %v647 = vmax.f32 %v615, 0.0
      %v648 = vmax.f32 %v616, 0.0
      %v649 = vmax.f32 %v617, 0.0
      %v650 = vmax.f32 %v618, 0.0
      %v651 = vmax.f32 %v619, 0.0
      %v652 = vmax.f32 %v620, 0.0
      %v653 = vmax.f32 %v621, 0.0
      %v654 = vmax.f32 %v622, 0.0
      %v655 = vmax.f32 %v623, 0.0
      %v656 = vmax.f32 %v624, 0.0
      %v657 = vmax.f32 %v625, 0.0
      %v658 = vmax.f32 %v626, 0.0
      %vm659 = vcmask 31744
      %660 = vst.msk [vmem:[#allocation2] sm:$0xff] %vm659, %v627
      %661 = vst.msk [vmem:[#allocation2 + $0x8] sm:$0xff] %vm659, %v628
      %662 = vst.msk [vmem:[#allocation2 + $0x10] sm:$0xff] %vm659, %v629
      %663 = vst.msk [vmem:[#allocation2 + $0x18] sm:$0xff] %vm659, %v630
      %664 = vst.msk [vmem:[#allocation2 + $0x20] sm:$0xff] %vm659, %v631
      %665 = vst.msk [vmem:[#allocation2 + $0x28] sm:$0xff] %vm659, %v632
      %666 = vst.msk [vmem:[#allocation2 + $0x30] sm:$0xff] %vm659, %v633
      %667 = vst.msk [vmem:[#allocation2 + $0x38] sm:$0xff] %vm659, %v634
      %668 = vst.msk [vmem:[#allocation2 + $0x40] sm:$0xff] %vm659, %v635
      %669 = vst.msk [vmem:[#allocation2 + $0x48] sm:$0xff] %vm659, %v636
      %670 = vst.msk [vmem:[#allocation2 + $0x50] sm:$0xff] %vm659, %v637
      %671 = vst.msk [vmem:[#allocation2 + $0x58] sm:$0xff] %vm659, %v638
      %672 = vst.msk [vmem:[#allocation2 + $0x60] sm:$0xff] %vm659, %v639
      %673 = vst.msk [vmem:[#allocation2 + $0x68] sm:$0xff] %vm659, %v640
      %674 = vst.msk [vmem:[#allocation2 + $0x70] sm:$0xff] %vm659, %v641
      %675 = vst.msk [vmem:[#allocation2 + $0x78] sm:$0xff] %vm659, %v642
      %676 = vst.msk [vmem:[#allocation2 + $0x80] sm:$0xff] %vm659, %v643
      %677 = vst.msk [vmem:[#allocation2 + $0x88] sm:$0xff] %vm659, %v644
      %678 = vst.msk [vmem:[#allocation2 + $0x90] sm:$0xff] %vm659, %v645
      %679 = vst.msk [vmem:[#allocation2 + $0x98] sm:$0xff] %vm659, %v646
      %680 = vst.msk [vmem:[#allocation2 + $0xa0] sm:$0xff] %vm659, %v647
      %681 = vst.msk [vmem:[#allocation2 + $0xa8] sm:$0xff] %vm659, %v648
      %682 = vst.msk [vmem:[#allocation2 + $0xb0] sm:$0xff] %vm659, %v649
      %683 = vst.msk [vmem:[#allocation2 + $0xb8] sm:$0xff] %vm659, %v650
      %684 = vst.msk [vmem:[#allocation2 + $0xc0] sm:$0xff] %vm659, %v651
      %685 = vst.msk [vmem:[#allocation2 + $0xc8] sm:$0xff] %vm659, %v652
      %686 = vst.msk [vmem:[#allocation2 + $0xd0] sm:$0xff] %vm659, %v653
      %687 = vst.msk [vmem:[#allocation2 + $0xd8] sm:$0xff] %vm659, %v654
      %688 = vst.msk [vmem:[#allocation2 + $0xe0] sm:$0xff] %vm659, %v655
      %689 = vst.msk [vmem:[#allocation2 + $0xe8] sm:$0xff] %vm659, %v656
      %690 = vst.msk [vmem:[#allocation2 + $0xf0] sm:$0xff] %vm659, %v657
      %691 = vst.msk [vmem:[#allocation2 + $0xf8] sm:$0xff] %vm659, %v658
      %692 = vst.msk [vmem:[#allocation2 + $0x100] sm:$0xff] %vm659, 0.0
      %v693 = vld [vmem:[#allocation2] sm:$0xff]
      %v694 = vld [vmem:[#allocation2 + $0x8] sm:$0xff]
      %v695 = vld [vmem:[#allocation2 + $0x10] sm:$0xff]
      %v696 = vld [vmem:[#allocation2 + $0x18] sm:$0xff]
      %v697 = vld [vmem:[#allocation2 + $0x20] sm:$0xff]
      %v698 = vld [vmem:[#allocation2 + $0x28] sm:$0xff]
      %v699 = vld [vmem:[#allocation2 + $0x30] sm:$0xff]
      %v700 = vld [vmem:[#allocation2 + $0x38] sm:$0xff]
      %v701 = vld [vmem:[#allocation2 + $0x40] sm:$0xff]
      %v702 = vld [vmem:[#allocation2 + $0x48] sm:$0xff]
      %v703 = vld [vmem:[#allocation2 + $0x50] sm:$0xff]
      %v704 = vld [vmem:[#allocation2 + $0x58] sm:$0xff]
      %v705 = vld [vmem:[#allocation2 + $0x60] sm:$0xff]
      %v706 = vld [vmem:[#allocation2 + $0x68] sm:$0xff]
      %v707 = vld [vmem:[#allocation2 + $0x70] sm:$0xff]
      %v708 = vld [vmem:[#allocation2 + $0x78] sm:$0xff]
      %v709 = vld [vmem:[#allocation2 + $0x80] sm:$0xff]
      %v710 = vld [vmem:[#allocation2 + $0x88] sm:$0xff]
      %v711 = vld [vmem:[#allocation2 + $0x90] sm:$0xff]
      %v712 = vld [vmem:[#allocation2 + $0x98] sm:$0xff]
      %v713 = vld [vmem:[#allocation2 + $0xa0] sm:$0xff]
      %v714 = vld [vmem:[#allocation2 + $0xa8] sm:$0xff]
      %v715 = vld [vmem:[#allocation2 + $0xb0] sm:$0xff]
      %v716 = vld [vmem:[#allocation2 + $0xb8] sm:$0xff]
      %v717 = vld [vmem:[#allocation2 + $0xc0] sm:$0xff]
      %v718 = vld [vmem:[#allocation2 + $0xc8] sm:$0xff]
      %v719 = vld [vmem:[#allocation2 + $0xd0] sm:$0xff]
      %v720 = vld [vmem:[#allocation2 + $0xd8] sm:$0xff]
      %v721 = vpack.c.bf16 %v694, %v693
      %v722 = vpack.c.bf16 %v696, %v695
      %v723 = vpack.c.bf16 %v698, %v697
      %v724 = vpack.c.bf16 %v700, %v699
      %v725 = vpack.c.bf16 %v702, %v701
      %v726 = vpack.c.bf16 %v704, %v703
      %v727 = vpack.c.bf16 %v706, %v705
      %v728 = vpack.c.bf16 %v708, %v707
      %v729 = vpack.c.bf16 %v710, %v709
      %v730 = vpack.c.bf16 %v712, %v711
      %v731 = vpack.c.bf16 %v714, %v713
      %v732 = vpack.c.bf16 %v716, %v715
      %v733 = vpack.c.bf16 %v718, %v717
      %v734 = vpack.c.bf16 %v720, %v719
      %v735 = vld [vmem:[%s2] sm:$0x3]
      %v736 = vld [vmem:[#allocation2 + $0x1] sm:$0xff]
      %v737 = vld [vmem:[#allocation2 + $0x9] sm:$0xff]
      %v738 = vld [vmem:[#allocation2 + $0x11] sm:$0xff]
      %v739 = vld [vmem:[#allocation2 + $0x19] sm:$0xff]
      %v740 = vld [vmem:[#allocation2 + $0x21] sm:$0xff]
      %v741 = vld [vmem:[#allocation2 + $0x29] sm:$0xff]
      %v742 = vld [vmem:[#allocation2 + $0x31] sm:$0xff]
      %v743 = vld [vmem:[#allocation2 + $0x39] sm:$0xff]
      %v744 = vld [vmem:[#allocation2 + $0x41] sm:$0xff]
      %v745 = vld [vmem:[#allocation2 + $0x49] sm:$0xff]
      %v746 = vld [vmem:[#allocation2 + $0x51] sm:$0xff]
      %v747 = vld [vmem:[#allocation2 + $0x59] sm:$0xff]
      %v748 = vld [vmem:[#allocation2 + $0x61] sm:$0xff]
      %v749 = vld [vmem:[#allocation2 + $0x69] sm:$0xff]
      %v750 = vld [vmem:[#allocation2 + $0x71] sm:$0xff]
      %v751 = vld [vmem:[#allocation2 + $0x79] sm:$0xff]
      %v752 = vld [vmem:[#allocation2 + $0x81] sm:$0xff]
      %v753 = vld [vmem:[#allocation2 + $0x89] sm:$0xff]
      %v754 = vld [vmem:[#allocation2 + $0x91] sm:$0xff]
      %v755 = vld [vmem:[#allocation2 + $0x99] sm:$0xff]
      %v756 = vld [vmem:[#allocation2 + $0xa1] sm:$0xff]
      %v757 = vld [vmem:[#allocation2 + $0xa9] sm:$0xff]
      %v758 = vld [vmem:[#allocation2 + $0xb1] sm:$0xff]
      %v759 = vld [vmem:[#allocation2 + $0xb9] sm:$0xff]
      %v760 = vld [vmem:[#allocation2 + $0xc1] sm:$0xff]
      %v761 = vld [vmem:[#allocation2 + $0xc9] sm:$0xff]
      %v762 = vld [vmem:[#allocation2 + $0xd1] sm:$0xff]
      %v763 = vld [vmem:[#allocation2 + $0xd9] sm:$0xff]
      %v764 = vpack.c.bf16 %v737, %v736
      %v765 = vpack.c.bf16 %v739, %v738
      %v766 = vpack.c.bf16 %v741, %v740
      %v767 = vpack.c.bf16 %v743, %v742
      %v768 = vpack.c.bf16 %v745, %v744
      %v769 = vpack.c.bf16 %v747, %v746
      %v770 = vpack.c.bf16 %v749, %v748
      %v771 = vpack.c.bf16 %v751, %v750
      %v772 = vpack.c.bf16 %v753, %v752
      %v773 = vpack.c.bf16 %v755, %v754
      %v774 = vpack.c.bf16 %v757, %v756
      %v775 = vpack.c.bf16 %v759, %v758
      %v776 = vpack.c.bf16 %v761, %v760
      %v777 = vpack.c.bf16 %v763, %v762
      %s778 = scalar_lea.vmem %s2, 2
      %v779 = vld [vmem:[%s778] sm:$0x3]
      %v781 = vsel %vm659, %v764, 0
      %v784 = vsel %vm659, %v765, 0
      %v787 = vsel %vm659, %v766, 0
      %v790 = vsel %vm659, %v767, 0
      %v793 = vsel %vm659, %v768, 0
      %v796 = vsel %vm659, %v769, 0
      %v799 = vsel %vm659, %v770, 0
      %v802 = vsel %vm659, %v771, 0
      %v805 = vsel %vm659, %v772, 0
      %v808 = vsel %vm659, %v773, 0
      %v811 = vsel %vm659, %v774, 0
      %v814 = vsel %vm659, %v775, 0
      %v817 = vsel %vm659, %v776, 0
      %v820 = vsel %vm659, %v777, 0
      %vm822 = vcmask 1041408
      %v824 = vsel %vm822, %v779, 0
      %826 = vmatpush.bf16.msra.mxu0 0
      %827 = vmatpush.bf16.msra.mxu0 0
      %828 = vmatpush.bf16.msra.mxu0 0
      %829 = vmatpush.bf16.msra.mxu0 0
      %830 = vmatpush.bf16.msra.mxu0 0
      %831 = vmatpush.bf16.msra.mxu0 0
      %832 = vmatpush.bf16.msra.mxu0 0
      %833 = vmatpush.bf16.msra.mxu0 %v824
      %834 = vmatmul.bf16.gmra.mxu0 %v781
      %v835 = vpop.f32.mrf.mxu0
      %v836 = vadd.f32 0.0, %v835
      %v837 = vpop.f32.mrf.mxu0
      %v838 = vadd.f32 0.0, %v837
      %839 = vmatmul.bf16.gmra.mxu0 %v784
      %v840 = vpop.f32.mrf.mxu0
      %v841 = vadd.f32 0.0, %v840
      %v842 = vpop.f32.mrf.mxu0
      %v843 = vadd.f32 0.0, %v842
      %844 = vmatmul.bf16.gmra.mxu0 %v787
      %v845 = vpop.f32.mrf.mxu0
      %v846 = vadd.f32 0.0, %v845
      %v847 = vpop.f32.mrf.mxu0
      %v848 = vadd.f32 0.0, %v847
      %849 = vmatmul.bf16.gmra.mxu0 %v790
      %v850 = vpop.f32.mrf.mxu0
      %v851 = vadd.f32 0.0, %v850
      %v852 = vpop.f32.mrf.mxu0
      %v853 = vadd.f32 0.0, %v852
      %854 = vmatmul.bf16.gmra.mxu0 %v793
      %v855 = vpop.f32.mrf.mxu0
      %v856 = vadd.f32 0.0, %v855
      %v857 = vpop.f32.mrf.mxu0
      %v858 = vadd.f32 0.0, %v857
      %859 = vmatmul.bf16.gmra.mxu0 %v796
      %v860 = vpop.f32.mrf.mxu0
      %v861 = vadd.f32 0.0, %v860
      %v862 = vpop.f32.mrf.mxu0
      %v863 = vadd.f32 0.0, %v862
      %864 = vmatmul.bf16.gmra.mxu0 %v799
      %v865 = vpop.f32.mrf.mxu0
      %v866 = vadd.f32 0.0, %v865
      %v867 = vpop.f32.mrf.mxu0
      %v868 = vadd.f32 0.0, %v867
      %869 = vmatmul.bf16.gmra.mxu0 %v802
      %v870 = vpop.f32.mrf.mxu0
      %v871 = vadd.f32 0.0, %v870
      %v872 = vpop.f32.mrf.mxu0
      %v873 = vadd.f32 0.0, %v872
      %874 = vmatmul.bf16.gmra.mxu0 %v805
      %v875 = vpop.f32.mrf.mxu0
      %v876 = vadd.f32 0.0, %v875
      %v877 = vpop.f32.mrf.mxu0
      %v878 = vadd.f32 0.0, %v877
      %879 = vmatmul.bf16.gmra.mxu0 %v808
      %v880 = vpop.f32.mrf.mxu0
      %v881 = vadd.f32 0.0, %v880
      %v882 = vpop.f32.mrf.mxu0
      %v883 = vadd.f32 0.0, %v882
      %884 = vmatmul.bf16.gmra.mxu0 %v811
      %v885 = vpop.f32.mrf.mxu0
      %v886 = vadd.f32 0.0, %v885
      %v887 = vpop.f32.mrf.mxu0
      %v888 = vadd.f32 0.0, %v887
      %889 = vmatmul.bf16.gmra.mxu0 %v814
      %v890 = vpop.f32.mrf.mxu0
      %v891 = vadd.f32 0.0, %v890
      %v892 = vpop.f32.mrf.mxu0
      %v893 = vadd.f32 0.0, %v892
      %894 = vmatmul.bf16.gmra.mxu0 %v817
      %v895 = vpop.f32.mrf.mxu0
      %v896 = vadd.f32 0.0, %v895
      %v897 = vpop.f32.mrf.mxu0
      %v898 = vadd.f32 0.0, %v897
      %899 = vmatmul.bf16.gmra.mxu0 %v820
      %v900 = vpop.f32.mrf.mxu0
      %v901 = vadd.f32 0.0, %v900
      %v902 = vpop.f32.mrf.mxu0
      %v903 = vadd.f32 0.0, %v902
      %904 = vdwg.mxu0
      %v906 = vsel %vm659, %v721, 0
      %v909 = vsel %vm659, %v722, 0
      %v912 = vsel %vm659, %v723, 0
      %v915 = vsel %vm659, %v724, 0
      %v918 = vsel %vm659, %v725, 0
      %v921 = vsel %vm659, %v726, 0
      %v924 = vsel %vm659, %v727, 0
      %v927 = vsel %vm659, %v728, 0
      %v930 = vsel %vm659, %v729, 0
      %v933 = vsel %vm659, %v730, 0
      %v936 = vsel %vm659, %v731, 0
      %v939 = vsel %vm659, %v732, 0
      %v942 = vsel %vm659, %v733, 0
      %v945 = vsel %vm659, %v734, 0
      %v948 = vsel %vm822, %v735, 0
      %950 = vmatpush.bf16.msra.mxu0 0
      %951 = vmatpush.bf16.msra.mxu0 0
      %952 = vmatpush.bf16.msra.mxu0 0
      %953 = vmatpush.bf16.msra.mxu0 0
      %954 = vmatpush.bf16.msra.mxu0 0
      %955 = vmatpush.bf16.msra.mxu0 0
      %956 = vmatpush.bf16.msra.mxu0 0
      %957 = vmatpush.bf16.msra.mxu0 %v948
      %958 = vmatmul.bf16.gmra.mxu0 %v906
      %v959 = vpop.f32.mrf.mxu0
      %v960 = vadd.f32 %v836, %v959
      %v961 = vpop.f32.mrf.mxu0
      %v962 = vadd.f32 %v838, %v961
      %963 = vmatmul.bf16.gmra.mxu0 %v909
      %v964 = vpop.f32.mrf.mxu0
      %v965 = vadd.f32 %v841, %v964
      %v966 = vpop.f32.mrf.mxu0
      %v967 = vadd.f32 %v843, %v966
      %968 = vmatmul.bf16.gmra.mxu0 %v912
      %v969 = vpop.f32.mrf.mxu0
      %v970 = vadd.f32 %v846, %v969
      %v971 = vpop.f32.mrf.mxu0
      %v972 = vadd.f32 %v848, %v971
      %973 = vmatmul.bf16.gmra.mxu0 %v915
      %v974 = vpop.f32.mrf.mxu0
      %v975 = vadd.f32 %v851, %v974
      %v976 = vpop.f32.mrf.mxu0
      %v977 = vadd.f32 %v853, %v976
      %978 = vmatmul.bf16.gmra.mxu0 %v918
      %v979 = vpop.f32.mrf.mxu0
      %v980 = vadd.f32 %v856, %v979
      %v981 = vpop.f32.mrf.mxu0
      %v982 = vadd.f32 %v858, %v981
      %983 = vmatmul.bf16.gmra.mxu0 %v921
      %v984 = vpop.f32.mrf.mxu0
      %v985 = vadd.f32 %v861, %v984
      %v986 = vpop.f32.mrf.mxu0
      %v987 = vadd.f32 %v863, %v986
      %988 = vmatmul.bf16.gmra.mxu0 %v924
      %v989 = vpop.f32.mrf.mxu0
      %v990 = vadd.f32 %v866, %v989
      %v991 = vpop.f32.mrf.mxu0
      %v992 = vadd.f32 %v868, %v991
      %993 = vmatmul.bf16.gmra.mxu0 %v927
      %v994 = vpop.f32.mrf.mxu0
      %v995 = vadd.f32 %v871, %v994
      %v996 = vpop.f32.mrf.mxu0
      %v997 = vadd.f32 %v873, %v996
      %998 = vmatmul.bf16.gmra.mxu0 %v930
      %v999 = vpop.f32.mrf.mxu0
      %v1000 = vadd.f32 %v876, %v999
      %v1001 = vpop.f32.mrf.mxu0
      %v1002 = vadd.f32 %v878, %v1001
      %1003 = vmatmul.bf16.gmra.mxu0 %v933
      %v1004 = vpop.f32.mrf.mxu0
      %v1005 = vadd.f32 %v881, %v1004
      %v1006 = vpop.f32.mrf.mxu0
      %v1007 = vadd.f32 %v883, %v1006
      %1008 = vmatmul.bf16.gmra.mxu0 %v936
      %v1009 = vpop.f32.mrf.mxu0
      %v1010 = vadd.f32 %v886, %v1009
      %v1011 = vpop.f32.mrf.mxu0
      %v1012 = vadd.f32 %v888, %v1011
      %1013 = vmatmul.bf16.gmra.mxu0 %v939
      %v1014 = vpop.f32.mrf.mxu0
      %v1015 = vadd.f32 %v891, %v1014
      %v1016 = vpop.f32.mrf.mxu0
      %v1017 = vadd.f32 %v893, %v1016
      %1018 = vmatmul.bf16.gmra.mxu0 %v942
      %v1019 = vpop.f32.mrf.mxu0
      %v1020 = vadd.f32 %v896, %v1019
      %v1021 = vpop.f32.mrf.mxu0
      %v1022 = vadd.f32 %v898, %v1021
      %1023 = vmatmul.bf16.gmra.mxu0 %v945
      %v1024 = vpop.f32.mrf.mxu0
      %v1025 = vadd.f32 %v901, %v1024
      %v1026 = vpop.f32.mrf.mxu0
      %v1027 = vadd.f32 %v903, %v1026
      %1028 = vdwg.mxu0
      %v1029 = vld [vmem:[#allocation2 + $0x2] sm:$0xff]
      %v1030 = vld [vmem:[#allocation2 + $0xa] sm:$0xff]
      %v1031 = vld [vmem:[#allocation2 + $0x12] sm:$0xff]
      %v1032 = vld [vmem:[#allocation2 + $0x1a] sm:$0xff]
      %v1033 = vld [vmem:[#allocation2 + $0x22] sm:$0xff]
      %v1034 = vld [vmem:[#allocation2 + $0x2a] sm:$0xff]
      %v1035 = vld [vmem:[#allocation2 + $0x32] sm:$0xff]
      %v1036 = vld [vmem:[#allocation2 + $0x3a] sm:$0xff]
      %v1037 = vld [vmem:[#allocation2 + $0x42] sm:$0xff]
      %v1038 = vld [vmem:[#allocation2 + $0x4a] sm:$0xff]
      %v1039 = vld [vmem:[#allocation2 + $0x52] sm:$0xff]
      %v1040 = vld [vmem:[#allocation2 + $0x5a] sm:$0xff]
      %v1041 = vld [vmem:[#allocation2 + $0x62] sm:$0xff]
      %v1042 = vld [vmem:[#allocation2 + $0x6a] sm:$0xff]
      %v1043 = vld [vmem:[#allocation2 + $0x72] sm:$0xff]
      %v1044 = vld [vmem:[#allocation2 + $0x7a] sm:$0xff]
      %v1045 = vld [vmem:[#allocation2 + $0x82] sm:$0xff]
      %v1046 = vld [vmem:[#allocation2 + $0x8a] sm:$0xff]
      %v1047 = vld [vmem:[#allocation2 + $0x92] sm:$0xff]
      %v1048 = vld [vmem:[#allocation2 + $0x9a] sm:$0xff]
      %v1049 = vld [vmem:[#allocation2 + $0xa2] sm:$0xff]
      %v1050 = vld [vmem:[#allocation2 + $0xaa] sm:$0xff]
      %v1051 = vld [vmem:[#allocation2 + $0xb2] sm:$0xff]
      %v1052 = vld [vmem:[#allocation2 + $0xba] sm:$0xff]
      %v1053 = vld [vmem:[#allocation2 + $0xc2] sm:$0xff]
      %v1054 = vld [vmem:[#allocation2 + $0xca] sm:$0xff]
      %v1055 = vld [vmem:[#allocation2 + $0xd2] sm:$0xff]
      %v1056 = vld [vmem:[#allocation2 + $0xda] sm:$0xff]
      %v1057 = vpack.c.bf16 %v1030, %v1029
      %v1058 = vpack.c.bf16 %v1032, %v1031
      %v1059 = vpack.c.bf16 %v1034, %v1033
      %v1060 = vpack.c.bf16 %v1036, %v1035
      %v1061 = vpack.c.bf16 %v1038, %v1037
      %v1062 = vpack.c.bf16 %v1040, %v1039
      %v1063 = vpack.c.bf16 %v1042, %v1041
      %v1064 = vpack.c.bf16 %v1044, %v1043
      %v1065 = vpack.c.bf16 %v1046, %v1045
      %v1066 = vpack.c.bf16 %v1048, %v1047
      %v1067 = vpack.c.bf16 %v1050, %v1049
      %v1068 = vpack.c.bf16 %v1052, %v1051
      %v1069 = vpack.c.bf16 %v1054, %v1053
      %v1070 = vpack.c.bf16 %v1056, %v1055
      %s1071 = scalar_lea.vmem %s2, 4
      %v1072 = vld [vmem:[%s1071] sm:$0x3]
      %v1074 = vsel %vm659, %v1057, 0
      %v1077 = vsel %vm659, %v1058, 0
      %v1080 = vsel %vm659, %v1059, 0
      %v1083 = vsel %vm659, %v1060, 0
      %v1086 = vsel %vm659, %v1061, 0
      %v1089 = vsel %vm659, %v1062, 0
      %v1092 = vsel %vm659, %v1063, 0
      %v1095 = vsel %vm659, %v1064, 0
      %v1098 = vsel %vm659, %v1065, 0
      %v1101 = vsel %vm659, %v1066, 0
      %v1104 = vsel %vm659, %v1067, 0
      %v1107 = vsel %vm659, %v1068, 0
      %v1110 = vsel %vm659, %v1069, 0
      %v1113 = vsel %vm659, %v1070, 0
      %v1116 = vsel %vm822, %v1072, 0
      %1118 = vmatpush.bf16.msra.mxu0 0
      %1119 = vmatpush.bf16.msra.mxu0 0
      %1120 = vmatpush.bf16.msra.mxu0 0
      %1121 = vmatpush.bf16.msra.mxu0 0
      %1122 = vmatpush.bf16.msra.mxu0 0
      %1123 = vmatpush.bf16.msra.mxu0 0
      %1124 = vmatpush.bf16.msra.mxu0 0
      %1125 = vmatpush.bf16.msra.mxu0 %v1116
      %1126 = vmatmul.bf16.gmra.mxu0 %v1074
      %v1127 = vpop.f32.mrf.mxu0
      %v1128 = vadd.f32 0.0, %v1127
      %v1129 = vpop.f32.mrf.mxu0
      %v1130 = vadd.f32 0.0, %v1129
      %1131 = vmatmul.bf16.gmra.mxu0 %v1077
      %v1132 = vpop.f32.mrf.mxu0
      %v1133 = vadd.f32 0.0, %v1132
      %v1134 = vpop.f32.mrf.mxu0
      %v1135 = vadd.f32 0.0, %v1134
      %1136 = vmatmul.bf16.gmra.mxu0 %v1080
      %v1137 = vpop.f32.mrf.mxu0
      %v1138 = vadd.f32 0.0, %v1137
      %v1139 = vpop.f32.mrf.mxu0
      %v1140 = vadd.f32 0.0, %v1139
      %1141 = vmatmul.bf16.gmra.mxu0 %v1083
      %v1142 = vpop.f32.mrf.mxu0
      %v1143 = vadd.f32 0.0, %v1142
      %v1144 = vpop.f32.mrf.mxu0
      %v1145 = vadd.f32 0.0, %v1144
      %1146 = vmatmul.bf16.gmra.mxu0 %v1086
      %v1147 = vpop.f32.mrf.mxu0
      %v1148 = vadd.f32 0.0, %v1147
      %v1149 = vpop.f32.mrf.mxu0
      %v1150 = vadd.f32 0.0, %v1149
      %1151 = vmatmul.bf16.gmra.mxu0 %v1089
      %v1152 = vpop.f32.mrf.mxu0
      %v1153 = vadd.f32 0.0, %v1152
      %v1154 = vpop.f32.mrf.mxu0
      %v1155 = vadd.f32 0.0, %v1154
      %1156 = vmatmul.bf16.gmra.mxu0 %v1092
      %v1157 = vpop.f32.mrf.mxu0
      %v1158 = vadd.f32 0.0, %v1157
      %v1159 = vpop.f32.mrf.mxu0
      %v1160 = vadd.f32 0.0, %v1159
      %1161 = vmatmul.bf16.gmra.mxu0 %v1095
      %v1162 = vpop.f32.mrf.mxu0
      %v1163 = vadd.f32 0.0, %v1162
      %v1164 = vpop.f32.mrf.mxu0
      %v1165 = vadd.f32 0.0, %v1164
      %1166 = vmatmul.bf16.gmra.mxu0 %v1098
      %v1167 = vpop.f32.mrf.mxu0
      %v1168 = vadd.f32 0.0, %v1167
      %v1169 = vpop.f32.mrf.mxu0
      %v1170 = vadd.f32 0.0, %v1169
      %1171 = vmatmul.bf16.gmra.mxu0 %v1101
      %v1172 = vpop.f32.mrf.mxu0
      %v1173 = vadd.f32 0.0, %v1172
      %v1174 = vpop.f32.mrf.mxu0
      %v1175 = vadd.f32 0.0, %v1174
      %1176 = vmatmul.bf16.gmra.mxu0 %v1104
      %v1177 = vpop.f32.mrf.mxu0
      %v1178 = vadd.f32 0.0, %v1177
      %v1179 = vpop.f32.mrf.mxu0
      %v1180 = vadd.f32 0.0, %v1179
      %1181 = vmatmul.bf16.gmra.mxu0 %v1107
      %v1182 = vpop.f32.mrf.mxu0
      %v1183 = vadd.f32 0.0, %v1182
      %v1184 = vpop.f32.mrf.mxu0
      %v1185 = vadd.f32 0.0, %v1184
      %1186 = vmatmul.bf16.gmra.mxu0 %v1110
      %v1187 = vpop.f32.mrf.mxu0
      %v1188 = vadd.f32 0.0, %v1187
      %v1189 = vpop.f32.mrf.mxu0
      %v1190 = vadd.f32 0.0, %v1189
      %1191 = vmatmul.bf16.gmra.mxu0 %v1113
      %v1192 = vpop.f32.mrf.mxu0
      %v1193 = vadd.f32 0.0, %v1192
      %v1194 = vpop.f32.mrf.mxu0
      %v1195 = vadd.f32 0.0, %v1194
      %1196 = vdwg.mxu0
      %v1197 = vadd.f32 %v960, %v1128
      %v1198 = vadd.f32 %v962, %v1130
      %v1199 = vadd.f32 %v965, %v1133
      %v1200 = vadd.f32 %v967, %v1135
      %v1201 = vadd.f32 %v970, %v1138
      %v1202 = vadd.f32 %v972, %v1140
      %v1203 = vadd.f32 %v975, %v1143
      %v1204 = vadd.f32 %v977, %v1145
      %v1205 = vadd.f32 %v980, %v1148
      %v1206 = vadd.f32 %v982, %v1150
      %v1207 = vadd.f32 %v985, %v1153
      %v1208 = vadd.f32 %v987, %v1155
      %v1209 = vadd.f32 %v990, %v1158
      %v1210 = vadd.f32 %v992, %v1160
      %v1211 = vadd.f32 %v995, %v1163
      %v1212 = vadd.f32 %v997, %v1165
      %v1213 = vadd.f32 %v1000, %v1168
      %v1214 = vadd.f32 %v1002, %v1170
      %v1215 = vadd.f32 %v1005, %v1173
      %v1216 = vadd.f32 %v1007, %v1175
      %v1217 = vadd.f32 %v1010, %v1178
      %v1218 = vadd.f32 %v1012, %v1180
      %v1219 = vadd.f32 %v1015, %v1183
      %v1220 = vadd.f32 %v1017, %v1185
      %v1221 = vadd.f32 %v1020, %v1188
      %v1222 = vadd.f32 %v1022, %v1190
      %v1223 = vadd.f32 %v1025, %v1193
      %v1224 = vadd.f32 %v1027, %v1195
      %v1225 = vld [vmem:[#allocation2 + $0x10] sm:$0xff]
      %v1226 = vld [vmem:[#allocation2 + $0x18] sm:$0xff]
      %v1227 = vld [vmem:[#allocation2 + $0x20] sm:$0xff]
      %v1228 = vld [vmem:[#allocation2 + $0x28] sm:$0xff]
      %v1229 = vld [vmem:[#allocation2 + $0x30] sm:$0xff]
      %v1230 = vld [vmem:[#allocation2 + $0x38] sm:$0xff]
      %v1231 = vld [vmem:[#allocation2 + $0x40] sm:$0xff]
      %v1232 = vld [vmem:[#allocation2 + $0x48] sm:$0xff]
      %v1233 = vld [vmem:[#allocation2 + $0x50] sm:$0xff]
      %v1234 = vld [vmem:[#allocation2 + $0x58] sm:$0xff]
      %v1235 = vld [vmem:[#allocation2 + $0x60] sm:$0xff]
      %v1236 = vld [vmem:[#allocation2 + $0x68] sm:$0xff]
      %v1237 = vld [vmem:[#allocation2 + $0x70] sm:$0xff]
      %v1238 = vld [vmem:[#allocation2 + $0x78] sm:$0xff]
      %v1239 = vld [vmem:[#allocation2 + $0x80] sm:$0xff]
      %v1240 = vld [vmem:[#allocation2 + $0x88] sm:$0xff]
      %v1241 = vld [vmem:[#allocation2 + $0x90] sm:$0xff]
      %v1242 = vld [vmem:[#allocation2 + $0x98] sm:$0xff]
      %v1243 = vld [vmem:[#allocation2 + $0xa0] sm:$0xff]
      %v1244 = vld [vmem:[#allocation2 + $0xa8] sm:$0xff]
      %v1245 = vld [vmem:[#allocation2 + $0xb0] sm:$0xff]
      %v1246 = vld [vmem:[#allocation2 + $0xb8] sm:$0xff]
      %v1247 = vld [vmem:[#allocation2 + $0xc0] sm:$0xff]
      %v1248 = vld [vmem:[#allocation2 + $0xc8] sm:$0xff]
      %v1249 = vld [vmem:[#allocation2 + $0xd0] sm:$0xff]
      %v1250 = vld [vmem:[#allocation2 + $0xd8] sm:$0xff]
      %v1251 = vld [vmem:[#allocation2 + $0xe0] sm:$0xff]
      %v1252 = vld [vmem:[#allocation2 + $0xe8] sm:$0xff]
      %v1253 = vpack.c.bf16 %v1226, %v1225
      %v1254 = vpack.c.bf16 %v1228, %v1227
      %v1255 = vpack.c.bf16 %v1230, %v1229
      %v1256 = vpack.c.bf16 %v1232, %v1231
      %v1257 = vpack.c.bf16 %v1234, %v1233
      %v1258 = vpack.c.bf16 %v1236, %v1235
      %v1259 = vpack.c.bf16 %v1238, %v1237
      %v1260 = vpack.c.bf16 %v1240, %v1239
      %v1261 = vpack.c.bf16 %v1242, %v1241
      %v1262 = vpack.c.bf16 %v1244, %v1243
      %v1263 = vpack.c.bf16 %v1246, %v1245
      %v1264 = vpack.c.bf16 %v1248, %v1247
      %v1265 = vpack.c.bf16 %v1250, %v1249
      %v1266 = vpack.c.bf16 %v1252, %v1251
      %s1267 = scalar_lea.vmem %s2, 6
      %v1268 = vld [vmem:[%s1267] sm:$0x3]
      %v1270 = vsel %vm659, %v1253, 0
      %v1273 = vsel %vm659, %v1254, 0
      %v1276 = vsel %vm659, %v1255, 0
      %v1279 = vsel %vm659, %v1256, 0
      %v1282 = vsel %vm659, %v1257, 0
      %v1285 = vsel %vm659, %v1258, 0
      %v1288 = vsel %vm659, %v1259, 0
      %v1291 = vsel %vm659, %v1260, 0
      %v1294 = vsel %vm659, %v1261, 0
      %v1297 = vsel %vm659, %v1262, 0
      %v1300 = vsel %vm659, %v1263, 0
      %v1303 = vsel %vm659, %v1264, 0
      %v1306 = vsel %vm659, %v1265, 0
      %v1309 = vsel %vm659, %v1266, 0
      %v1312 = vsel %vm822, %v1268, 0
      %1314 = vmatpush.bf16.msra.mxu0 0
      %1315 = vmatpush.bf16.msra.mxu0 0
      %1316 = vmatpush.bf16.msra.mxu0 0
      %1317 = vmatpush.bf16.msra.mxu0 0
      %1318 = vmatpush.bf16.msra.mxu0 0
      %1319 = vmatpush.bf16.msra.mxu0 0
      %1320 = vmatpush.bf16.msra.mxu0 0
      %1321 = vmatpush.bf16.msra.mxu0 %v1312
      %1322 = vmatmul.bf16.gmra.mxu0 %v1270
      %v1323 = vpop.f32.mrf.mxu0
      %v1324 = vadd.f32 0.0, %v1323
      %v1325 = vpop.f32.mrf.mxu0
      %v1326 = vadd.f32 0.0, %v1325
      %1327 = vmatmul.bf16.gmra.mxu0 %v1273
      %v1328 = vpop.f32.mrf.mxu0
      %v1329 = vadd.f32 0.0, %v1328
      %v1330 = vpop.f32.mrf.mxu0
      %v1331 = vadd.f32 0.0, %v1330
      %1332 = vmatmul.bf16.gmra.mxu0 %v1276
      %v1333 = vpop.f32.mrf.mxu0
      %v1334 = vadd.f32 0.0, %v1333
      %v1335 = vpop.f32.mrf.mxu0
      %v1336 = vadd.f32 0.0, %v1335
      %1337 = vmatmul.bf16.gmra.mxu0 %v1279
      %v1338 = vpop.f32.mrf.mxu0
      %v1339 = vadd.f32 0.0, %v1338
      %v1340 = vpop.f32.mrf.mxu0
      %v1341 = vadd.f32 0.0, %v1340
      %1342 = vmatmul.bf16.gmra.mxu0 %v1282
      %v1343 = vpop.f32.mrf.mxu0
      %v1344 = vadd.f32 0.0, %v1343
      %v1345 = vpop.f32.mrf.mxu0
      %v1346 = vadd.f32 0.0, %v1345
      %1347 = vmatmul.bf16.gmra.mxu0 %v1285
      %v1348 = vpop.f32.mrf.mxu0
      %v1349 = vadd.f32 0.0, %v1348
      %v1350 = vpop.f32.mrf.mxu0
      %v1351 = vadd.f32 0.0, %v1350
      %1352 = vmatmul.bf16.gmra.mxu0 %v1288
      %v1353 = vpop.f32.mrf.mxu0
      %v1354 = vadd.f32 0.0, %v1353
      %v1355 = vpop.f32.mrf.mxu0
      %v1356 = vadd.f32 0.0, %v1355
      %1357 = vmatmul.bf16.gmra.mxu0 %v1291
      %v1358 = vpop.f32.mrf.mxu0
      %v1359 = vadd.f32 0.0, %v1358
      %v1360 = vpop.f32.mrf.mxu0
      %v1361 = vadd.f32 0.0, %v1360
      %1362 = vmatmul.bf16.gmra.mxu0 %v1294
      %v1363 = vpop.f32.mrf.mxu0
      %v1364 = vadd.f32 0.0, %v1363
      %v1365 = vpop.f32.mrf.mxu0
      %v1366 = vadd.f32 0.0, %v1365
      %1367 = vmatmul.bf16.gmra.mxu0 %v1297
      %v1368 = vpop.f32.mrf.mxu0
      %v1369 = vadd.f32 0.0, %v1368
      %v1370 = vpop.f32.mrf.mxu0
      %v1371 = vadd.f32 0.0, %v1370
      %1372 = vmatmul.bf16.gmra.mxu0 %v1300
      %v1373 = vpop.f32.mrf.mxu0
      %v1374 = vadd.f32 0.0, %v1373
      %v1375 = vpop.f32.mrf.mxu0
      %v1376 = vadd.f32 0.0, %v1375
      %1377 = vmatmul.bf16.gmra.mxu0 %v1303
      %v1378 = vpop.f32.mrf.mxu0
      %v1379 = vadd.f32 0.0, %v1378
      %v1380 = vpop.f32.mrf.mxu0
      %v1381 = vadd.f32 0.0, %v1380
      %1382 = vmatmul.bf16.gmra.mxu0 %v1306
      %v1383 = vpop.f32.mrf.mxu0
      %v1384 = vadd.f32 0.0, %v1383
      %v1385 = vpop.f32.mrf.mxu0
      %v1386 = vadd.f32 0.0, %v1385
      %1387 = vmatmul.bf16.gmra.mxu0 %v1309
      %v1388 = vpop.f32.mrf.mxu0
      %v1389 = vadd.f32 0.0, %v1388
      %v1390 = vpop.f32.mrf.mxu0
      %v1391 = vadd.f32 0.0, %v1390
      %1392 = vdwg.mxu0
      %v1393 = vadd.f32 %v1197, %v1324
      %v1394 = vadd.f32 %v1198, %v1326
      %v1395 = vadd.f32 %v1199, %v1329
      %v1396 = vadd.f32 %v1200, %v1331
      %v1397 = vadd.f32 %v1201, %v1334
      %v1398 = vadd.f32 %v1202, %v1336
      %v1399 = vadd.f32 %v1203, %v1339
      %v1400 = vadd.f32 %v1204, %v1341
      %v1401 = vadd.f32 %v1205, %v1344
      %v1402 = vadd.f32 %v1206, %v1346
      %v1403 = vadd.f32 %v1207, %v1349
      %v1404 = vadd.f32 %v1208, %v1351
      %v1405 = vadd.f32 %v1209, %v1354
      %v1406 = vadd.f32 %v1210, %v1356
      %v1407 = vadd.f32 %v1211, %v1359
      %v1408 = vadd.f32 %v1212, %v1361
      %v1409 = vadd.f32 %v1213, %v1364
      %v1410 = vadd.f32 %v1214, %v1366
      %v1411 = vadd.f32 %v1215, %v1369
      %v1412 = vadd.f32 %v1216, %v1371
      %v1413 = vadd.f32 %v1217, %v1374
      %v1414 = vadd.f32 %v1218, %v1376
      %v1415 = vadd.f32 %v1219, %v1379
      %v1416 = vadd.f32 %v1220, %v1381
      %v1417 = vadd.f32 %v1221, %v1384
      %v1418 = vadd.f32 %v1222, %v1386
      %v1419 = vadd.f32 %v1223, %v1389
      %v1420 = vadd.f32 %v1224, %v1391
      %v1421 = vld [vmem:[#allocation2 + $0x11] sm:$0xff]
      %v1422 = vld [vmem:[#allocation2 + $0x19] sm:$0xff]
      %v1423 = vld [vmem:[#allocation2 + $0x21] sm:$0xff]
      %v1424 = vld [vmem:[#allocation2 + $0x29] sm:$0xff]
      %v1425 = vld [vmem:[#allocation2 + $0x31] sm:$0xff]
      %v1426 = vld [vmem:[#allocation2 + $0x39] sm:$0xff]
      %v1427 = vld [vmem:[#allocation2 + $0x41] sm:$0xff]
      %v1428 = vld [vmem:[#allocation2 + $0x49] sm:$0xff]
      %v1429 = vld [vmem:[#allocation2 + $0x51] sm:$0xff]
      %v1430 = vld [vmem:[#allocation2 + $0x59] sm:$0xff]
      %v1431 = vld [vmem:[#allocation2 + $0x61] sm:$0xff]
      %v1432 = vld [vmem:[#allocation2 + $0x69] sm:$0xff]
      %v1433 = vld [vmem:[#allocation2 + $0x71] sm:$0xff]
      %v1434 = vld [vmem:[#allocation2 + $0x79] sm:$0xff]
      %v1435 = vld [vmem:[#allocation2 + $0x81] sm:$0xff]
      %v1436 = vld [vmem:[#allocation2 + $0x89] sm:$0xff]
      %v1437 = vld [vmem:[#allocation2 + $0x91] sm:$0xff]
      %v1438 = vld [vmem:[#allocation2 + $0x99] sm:$0xff]
      %v1439 = vld [vmem:[#allocation2 + $0xa1] sm:$0xff]
      %v1440 = vld [vmem:[#allocation2 + $0xa9] sm:$0xff]
      %v1441 = vld [vmem:[#allocation2 + $0xb1] sm:$0xff]
      %v1442 = vld [vmem:[#allocation2 + $0xb9] sm:$0xff]
      %v1443 = vld [vmem:[#allocation2 + $0xc1] sm:$0xff]
      %v1444 = vld [vmem:[#allocation2 + $0xc9] sm:$0xff]
      %v1445 = vld [vmem:[#allocation2 + $0xd1] sm:$0xff]
      %v1446 = vld [vmem:[#allocation2 + $0xd9] sm:$0xff]
      %v1447 = vld [vmem:[#allocation2 + $0xe1] sm:$0xff]
      %v1448 = vld [vmem:[#allocation2 + $0xe9] sm:$0xff]
      %v1449 = vpack.c.bf16 %v1422, %v1421
      %v1450 = vpack.c.bf16 %v1424, %v1423
      %v1451 = vpack.c.bf16 %v1426, %v1425
      %v1452 = vpack.c.bf16 %v1428, %v1427
      %v1453 = vpack.c.bf16 %v1430, %v1429
      %v1454 = vpack.c.bf16 %v1432, %v1431
      %v1455 = vpack.c.bf16 %v1434, %v1433
      %v1456 = vpack.c.bf16 %v1436, %v1435
      %v1457 = vpack.c.bf16 %v1438, %v1437
      %v1458 = vpack.c.bf16 %v1440, %v1439
      %v1459 = vpack.c.bf16 %v1442, %v1441
      %v1460 = vpack.c.bf16 %v1444, %v1443
      %v1461 = vpack.c.bf16 %v1446, %v1445
      %v1462 = vpack.c.bf16 %v1448, %v1447
      %s1463 = scalar_lea.vmem %s2, 8
      %v1464 = vld [vmem:[%s1463] sm:$0x3]
      %v1466 = vsel %vm659, %v1449, 0
      %v1469 = vsel %vm659, %v1450, 0
      %v1472 = vsel %vm659, %v1451, 0
      %v1475 = vsel %vm659, %v1452, 0
      %v1478 = vsel %vm659, %v1453, 0
      %v1481 = vsel %vm659, %v1454, 0
      %v1484 = vsel %vm659, %v1455, 0
      %v1487 = vsel %vm659, %v1456, 0
      %v1490 = vsel %vm659, %v1457, 0
      %v1493 = vsel %vm659, %v1458, 0
      %v1496 = vsel %vm659, %v1459, 0
      %v1499 = vsel %vm659, %v1460, 0
      %v1502 = vsel %vm659, %v1461, 0
      %v1505 = vsel %vm659, %v1462, 0
      %v1508 = vsel %vm822, %v1464, 0
      %1510 = vmatpush.bf16.msra.mxu0 0
      %1511 = vmatpush.bf16.msra.mxu0 0
      %1512 = vmatpush.bf16.msra.mxu0 0
      %1513 = vmatpush.bf16.msra.mxu0 0
      %1514 = vmatpush.bf16.msra.mxu0 0
      %1515 = vmatpush.bf16.msra.mxu0 0
      %1516 = vmatpush.bf16.msra.mxu0 0
      %1517 = vmatpush.bf16.msra.mxu0 %v1508
      %1518 = vmatmul.bf16.gmra.mxu0 %v1466
      %v1519 = vpop.f32.mrf.mxu0
      %v1520 = vadd.f32 0.0, %v1519
      %v1521 = vpop.f32.mrf.mxu0
      %v1522 = vadd.f32 0.0, %v1521
      %1523 = vmatmul.bf16.gmra.mxu0 %v1469
      %v1524 = vpop.f32.mrf.mxu0
      %v1525 = vadd.f32 0.0, %v1524
      %v1526 = vpop.f32.mrf.mxu0
      %v1527 = vadd.f32 0.0, %v1526
      %1528 = vmatmul.bf16.gmra.mxu0 %v1472
      %v1529 = vpop.f32.mrf.mxu0
      %v1530 = vadd.f32 0.0, %v1529
      %v1531 = vpop.f32.mrf.mxu0
      %v1532 = vadd.f32 0.0, %v1531
      %1533 = vmatmul.bf16.gmra.mxu0 %v1475
      %v1534 = vpop.f32.mrf.mxu0
      %v1535 = vadd.f32 0.0, %v1534
      %v1536 = vpop.f32.mrf.mxu0
      %v1537 = vadd.f32 0.0, %v1536
      %1538 = vmatmul.bf16.gmra.mxu0 %v1478
      %v1539 = vpop.f32.mrf.mxu0
      %v1540 = vadd.f32 0.0, %v1539
      %v1541 = vpop.f32.mrf.mxu0
      %v1542 = vadd.f32 0.0, %v1541
      %1543 = vmatmul.bf16.gmra.mxu0 %v1481
      %v1544 = vpop.f32.mrf.mxu0
      %v1545 = vadd.f32 0.0, %v1544
      %v1546 = vpop.f32.mrf.mxu0
      %v1547 = vadd.f32 0.0, %v1546
      %1548 = vmatmul.bf16.gmra.mxu0 %v1484
      %v1549 = vpop.f32.mrf.mxu0
      %v1550 = vadd.f32 0.0, %v1549
      %v1551 = vpop.f32.mrf.mxu0
      %v1552 = vadd.f32 0.0, %v1551
      %1553 = vmatmul.bf16.gmra.mxu0 %v1487
      %v1554 = vpop.f32.mrf.mxu0
      %v1555 = vadd.f32 0.0, %v1554
      %v1556 = vpop.f32.mrf.mxu0
      %v1557 = vadd.f32 0.0, %v1556
      %1558 = vmatmul.bf16.gmra.mxu0 %v1490
      %v1559 = vpop.f32.mrf.mxu0
      %v1560 = vadd.f32 0.0, %v1559
      %v1561 = vpop.f32.mrf.mxu0
      %v1562 = vadd.f32 0.0, %v1561
      %1563 = vmatmul.bf16.gmra.mxu0 %v1493
      %v1564 = vpop.f32.mrf.mxu0
      %v1565 = vadd.f32 0.0, %v1564
      %v1566 = vpop.f32.mrf.mxu0
      %v1567 = vadd.f32 0.0, %v1566
      %1568 = vmatmul.bf16.gmra.mxu0 %v1496
      %v1569 = vpop.f32.mrf.mxu0
      %v1570 = vadd.f32 0.0, %v1569
      %v1571 = vpop.f32.mrf.mxu0
      %v1572 = vadd.f32 0.0, %v1571
      %1573 = vmatmul.bf16.gmra.mxu0 %v1499
      %v1574 = vpop.f32.mrf.mxu0
      %v1575 = vadd.f32 0.0, %v1574
      %v1576 = vpop.f32.mrf.mxu0
      %v1577 = vadd.f32 0.0, %v1576
      %1578 = vmatmul.bf16.gmra.mxu0 %v1502
      %v1579 = vpop.f32.mrf.mxu0
      %v1580 = vadd.f32 0.0, %v1579
      %v1581 = vpop.f32.mrf.mxu0
      %v1582 = vadd.f32 0.0, %v1581
      %1583 = vmatmul.bf16.gmra.mxu0 %v1505
      %v1584 = vpop.f32.mrf.mxu0
      %v1585 = vadd.f32 0.0, %v1584
      %v1586 = vpop.f32.mrf.mxu0
      %v1587 = vadd.f32 0.0, %v1586
      %1588 = vdwg.mxu0
      %v1589 = vadd.f32 %v1393, %v1520
      %v1590 = vadd.f32 %v1394, %v1522
      %v1591 = vadd.f32 %v1395, %v1525
      %v1592 = vadd.f32 %v1396, %v1527
      %v1593 = vadd.f32 %v1397, %v1530
      %v1594 = vadd.f32 %v1398, %v1532
      %v1595 = vadd.f32 %v1399, %v1535
      %v1596 = vadd.f32 %v1400, %v1537
      %v1597 = vadd.f32 %v1401, %v1540
      %v1598 = vadd.f32 %v1402, %v1542
      %v1599 = vadd.f32 %v1403, %v1545
      %v1600 = vadd.f32 %v1404, %v1547
      %v1601 = vadd.f32 %v1405, %v1550
      %v1602 = vadd.f32 %v1406, %v1552
      %v1603 = vadd.f32 %v1407, %v1555
      %v1604 = vadd.f32 %v1408, %v1557
      %v1605 = vadd.f32 %v1409, %v1560
      %v1606 = vadd.f32 %v1410, %v1562
      %v1607 = vadd.f32 %v1411, %v1565
      %v1608 = vadd.f32 %v1412, %v1567
      %v1609 = vadd.f32 %v1413, %v1570
      %v1610 = vadd.f32 %v1414, %v1572
      %v1611 = vadd.f32 %v1415, %v1575
      %v1612 = vadd.f32 %v1416, %v1577
      %v1613 = vadd.f32 %v1417, %v1580
      %v1614 = vadd.f32 %v1418, %v1582
      %v1615 = vadd.f32 %v1419, %v1585
      %v1616 = vadd.f32 %v1420, %v1587
      %v1617 = vld [vmem:[#allocation2 + $0x12] sm:$0xff]
      %v1618 = vld [vmem:[#allocation2 + $0x1a] sm:$0xff]
      %v1619 = vld [vmem:[#allocation2 + $0x22] sm:$0xff]
      %v1620 = vld [vmem:[#allocation2 + $0x2a] sm:$0xff]
      %v1621 = vld [vmem:[#allocation2 + $0x32] sm:$0xff]
      %v1622 = vld [vmem:[#allocation2 + $0x3a] sm:$0xff]
      %v1623 = vld [vmem:[#allocation2 + $0x42] sm:$0xff]
      %v1624 = vld [vmem:[#allocation2 + $0x4a] sm:$0xff]
      %v1625 = vld [vmem:[#allocation2 + $0x52] sm:$0xff]
      %v1626 = vld [vmem:[#allocation2 + $0x5a] sm:$0xff]
      %v1627 = vld [vmem:[#allocation2 + $0x62] sm:$0xff]
      %v1628 = vld [vmem:[#allocation2 + $0x6a] sm:$0xff]
      %v1629 = vld [vmem:[#allocation2 + $0x72] sm:$0xff]
      %v1630 = vld [vmem:[#allocation2 + $0x7a] sm:$0xff]
      %v1631 = vld [vmem:[#allocation2 + $0x82] sm:$0xff]
      %v1632 = vld [vmem:[#allocation2 + $0x8a] sm:$0xff]
      %v1633 = vld [vmem:[#allocation2 + $0x92] sm:$0xff]
      %v1634 = vld [vmem:[#allocation2 + $0x9a] sm:$0xff]
      %v1635 = vld [vmem:[#allocation2 + $0xa2] sm:$0xff]
      %v1636 = vld [vmem:[#allocation2 + $0xaa] sm:$0xff]
      %v1637 = vld [vmem:[#allocation2 + $0xb2] sm:$0xff]
      %v1638 = vld [vmem:[#allocation2 + $0xba] sm:$0xff]
      %v1639 = vld [vmem:[#allocation2 + $0xc2] sm:$0xff]
      %v1640 = vld [vmem:[#allocation2 + $0xca] sm:$0xff]
      %v1641 = vld [vmem:[#allocation2 + $0xd2] sm:$0xff]
      %v1642 = vld [vmem:[#allocation2 + $0xda] sm:$0xff]
      %v1643 = vld [vmem:[#allocation2 + $0xe2] sm:$0xff]
      %v1644 = vld [vmem:[#allocation2 + $0xea] sm:$0xff]
      %v1645 = vpack.c.bf16 %v1618, %v1617
      %v1646 = vpack.c.bf16 %v1620, %v1619
      %v1647 = vpack.c.bf16 %v1622, %v1621
      %v1648 = vpack.c.bf16 %v1624, %v1623
      %v1649 = vpack.c.bf16 %v1626, %v1625
      %v1650 = vpack.c.bf16 %v1628, %v1627
      %v1651 = vpack.c.bf16 %v1630, %v1629
      %v1652 = vpack.c.bf16 %v1632, %v1631
      %v1653 = vpack.c.bf16 %v1634, %v1633
      %v1654 = vpack.c.bf16 %v1636, %v1635
      %v1655 = vpack.c.bf16 %v1638, %v1637
      %v1656 = vpack.c.bf16 %v1640, %v1639
      %v1657 = vpack.c.bf16 %v1642, %v1641
      %v1658 = vpack.c.bf16 %v1644, %v1643
      %s1659 = scalar_lea.vmem %s2, 10
      %v1660 = vld [vmem:[%s1659] sm:$0x3]
      %v1662 = vsel %vm659, %v1645, 0
      %v1665 = vsel %vm659, %v1646, 0
      %v1668 = vsel %vm659, %v1647, 0
      %v1671 = vsel %vm659, %v1648, 0
      %v1674 = vsel %vm659, %v1649, 0
      %v1677 = vsel %vm659, %v1650, 0
      %v1680 = vsel %vm659, %v1651, 0
      %v1683 = vsel %vm659, %v1652, 0
      %v1686 = vsel %vm659, %v1653, 0
      %v1689 = vsel %vm659, %v1654, 0
      %v1692 = vsel %vm659, %v1655, 0
      %v1695 = vsel %vm659, %v1656, 0
      %v1698 = vsel %vm659, %v1657, 0
      %v1701 = vsel %vm659, %v1658, 0
      %v1704 = vsel %vm822, %v1660, 0
      %1706 = vmatpush.bf16.msra.mxu0 0
      %1707 = vmatpush.bf16.msra.mxu0 0
      %1708 = vmatpush.bf16.msra.mxu0 0
      %1709 = vmatpush.bf16.msra.mxu0 0
      %1710 = vmatpush.bf16.msra.mxu0 0
      %1711 = vmatpush.bf16.msra.mxu0 0
      %1712 = vmatpush.bf16.msra.mxu0 0
      %1713 = vmatpush.bf16.msra.mxu0 %v1704
      %1714 = vmatmul.bf16.gmra.mxu0 %v1662
      %v1715 = vpop.f32.mrf.mxu0
      %v1716 = vadd.f32 0.0, %v1715
      %v1717 = vpop.f32.mrf.mxu0
      %v1718 = vadd.f32 0.0, %v1717
      %1719 = vmatmul.bf16.gmra.mxu0 %v1665
      %v1720 = vpop.f32.mrf.mxu0
      %v1721 = vadd.f32 0.0, %v1720
      %v1722 = vpop.f32.mrf.mxu0
      %v1723 = vadd.f32 0.0, %v1722
      %1724 = vmatmul.bf16.gmra.mxu0 %v1668
      %v1725 = vpop.f32.mrf.mxu0
      %v1726 = vadd.f32 0.0, %v1725
      %v1727 = vpop.f32.mrf.mxu0
      %v1728 = vadd.f32 0.0, %v1727
      %1729 = vmatmul.bf16.gmra.mxu0 %v1671
      %v1730 = vpop.f32.mrf.mxu0
      %v1731 = vadd.f32 0.0, %v1730
      %v1732 = vpop.f32.mrf.mxu0
      %v1733 = vadd.f32 0.0, %v1732
      %1734 = vmatmul.bf16.gmra.mxu0 %v1674
      %v1735 = vpop.f32.mrf.mxu0
      %v1736 = vadd.f32 0.0, %v1735
      %v1737 = vpop.f32.mrf.mxu0
      %v1738 = vadd.f32 0.0, %v1737
      %1739 = vmatmul.bf16.gmra.mxu0 %v1677
      %v1740 = vpop.f32.mrf.mxu0
      %v1741 = vadd.f32 0.0, %v1740
      %v1742 = vpop.f32.mrf.mxu0
      %v1743 = vadd.f32 0.0, %v1742
      %1744 = vmatmul.bf16.gmra.mxu0 %v1680
      %v1745 = vpop.f32.mrf.mxu0
      %v1746 = vadd.f32 0.0, %v1745
      %v1747 = vpop.f32.mrf.mxu0
      %v1748 = vadd.f32 0.0, %v1747
      %1749 = vmatmul.bf16.gmra.mxu0 %v1683
      %v1750 = vpop.f32.mrf.mxu0
      %v1751 = vadd.f32 0.0, %v1750
      %v1752 = vpop.f32.mrf.mxu0
      %v1753 = vadd.f32 0.0, %v1752
      %1754 = vmatmul.bf16.gmra.mxu0 %v1686
      %v1755 = vpop.f32.mrf.mxu0
      %v1756 = vadd.f32 0.0, %v1755
      %v1757 = vpop.f32.mrf.mxu0
      %v1758 = vadd.f32 0.0, %v1757
      %1759 = vmatmul.bf16.gmra.mxu0 %v1689
      %v1760 = vpop.f32.mrf.mxu0
      %v1761 = vadd.f32 0.0, %v1760
      %v1762 = vpop.f32.mrf.mxu0
      %v1763 = vadd.f32 0.0, %v1762
      %1764 = vmatmul.bf16.gmra.mxu0 %v1692
      %v1765 = vpop.f32.mrf.mxu0
      %v1766 = vadd.f32 0.0, %v1765
      %v1767 = vpop.f32.mrf.mxu0
      %v1768 = vadd.f32 0.0, %v1767
      %1769 = vmatmul.bf16.gmra.mxu0 %v1695
      %v1770 = vpop.f32.mrf.mxu0
      %v1771 = vadd.f32 0.0, %v1770
      %v1772 = vpop.f32.mrf.mxu0
      %v1773 = vadd.f32 0.0, %v1772
      %1774 = vmatmul.bf16.gmra.mxu0 %v1698
      %v1775 = vpop.f32.mrf.mxu0
      %v1776 = vadd.f32 0.0, %v1775
      %v1777 = vpop.f32.mrf.mxu0
      %v1778 = vadd.f32 0.0, %v1777
      %1779 = vmatmul.bf16.gmra.mxu0 %v1701
      %v1780 = vpop.f32.mrf.mxu0
      %v1781 = vadd.f32 0.0, %v1780
      %v1782 = vpop.f32.mrf.mxu0
      %v1783 = vadd.f32 0.0, %v1782
      %1784 = vdwg.mxu0
      %v1785 = vadd.f32 %v1589, %v1716
      %v1786 = vadd.f32 %v1590, %v1718
      %v1787 = vadd.f32 %v1591, %v1721
      %v1788 = vadd.f32 %v1592, %v1723
      %v1789 = vadd.f32 %v1593, %v1726
      %v1790 = vadd.f32 %v1594, %v1728
      %v1791 = vadd.f32 %v1595, %v1731
      %v1792 = vadd.f32 %v1596, %v1733
      %v1793 = vadd.f32 %v1597, %v1736
      %v1794 = vadd.f32 %v1598, %v1738
      %v1795 = vadd.f32 %v1599, %v1741
      %v1796 = vadd.f32 %v1600, %v1743
      %v1797 = vadd.f32 %v1601, %v1746
      %v1798 = vadd.f32 %v1602, %v1748
      %v1799 = vadd.f32 %v1603, %v1751
      %v1800 = vadd.f32 %v1604, %v1753
      %v1801 = vadd.f32 %v1605, %v1756
      %v1802 = vadd.f32 %v1606, %v1758
      %v1803 = vadd.f32 %v1607, %v1761
      %v1804 = vadd.f32 %v1608, %v1763
      %v1805 = vadd.f32 %v1609, %v1766
      %v1806 = vadd.f32 %v1610, %v1768
      %v1807 = vadd.f32 %v1611, %v1771
      %v1808 = vadd.f32 %v1612, %v1773
      %v1809 = vadd.f32 %v1613, %v1776
      %v1810 = vadd.f32 %v1614, %v1778
      %v1811 = vadd.f32 %v1615, %v1781
      %v1812 = vadd.f32 %v1616, %v1783
      %v1813 = vld [vmem:[#allocation2 + $0x20] sm:$0xff]
      %v1814 = vld [vmem:[#allocation2 + $0x28] sm:$0xff]
      %v1815 = vld [vmem:[#allocation2 + $0x30] sm:$0xff]
      %v1816 = vld [vmem:[#allocation2 + $0x38] sm:$0xff]
      %v1817 = vld [vmem:[#allocation2 + $0x40] sm:$0xff]
      %v1818 = vld [vmem:[#allocation2 + $0x48] sm:$0xff]
      %v1819 = vld [vmem:[#allocation2 + $0x50] sm:$0xff]
      %v1820 = vld [vmem:[#allocation2 + $0x58] sm:$0xff]
      %v1821 = vld [vmem:[#allocation2 + $0x60] sm:$0xff]
      %v1822 = vld [vmem:[#allocation2 + $0x68] sm:$0xff]
      %v1823 = vld [vmem:[#allocation2 + $0x70] sm:$0xff]
      %v1824 = vld [vmem:[#allocation2 + $0x78] sm:$0xff]
      %v1825 = vld [vmem:[#allocation2 + $0x80] sm:$0xff]
      %v1826 = vld [vmem:[#allocation2 + $0x88] sm:$0xff]
      %v1827 = vld [vmem:[#allocation2 + $0x90] sm:$0xff]
      %v1828 = vld [vmem:[#allocation2 + $0x98] sm:$0xff]
      %v1829 = vld [vmem:[#allocation2 + $0xa0] sm:$0xff]
      %v1830 = vld [vmem:[#allocation2 + $0xa8] sm:$0xff]
      %v1831 = vld [vmem:[#allocation2 + $0xb0] sm:$0xff]
      %v1832 = vld [vmem:[#allocation2 + $0xb8] sm:$0xff]
      %v1833 = vld [vmem:[#allocation2 + $0xc0] sm:$0xff]
      %v1834 = vld [vmem:[#allocation2 + $0xc8] sm:$0xff]
      %v1835 = vld [vmem:[#allocation2 + $0xd0] sm:$0xff]
      %v1836 = vld [vmem:[#allocation2 + $0xd8] sm:$0xff]
      %v1837 = vld [vmem:[#allocation2 + $0xe0] sm:$0xff]
      %v1838 = vld [vmem:[#allocation2 + $0xe8] sm:$0xff]
      %v1839 = vld [vmem:[#allocation2 + $0xf0] sm:$0xff]
      %v1840 = vld [vmem:[#allocation2 + $0xf8] sm:$0xff]
      %v1841 = vpack.c.bf16 %v1814, %v1813
      %v1842 = vpack.c.bf16 %v1816, %v1815
      %v1843 = vpack.c.bf16 %v1818, %v1817
      %v1844 = vpack.c.bf16 %v1820, %v1819
      %v1845 = vpack.c.bf16 %v1822, %v1821
      %v1846 = vpack.c.bf16 %v1824, %v1823
      %v1847 = vpack.c.bf16 %v1826, %v1825
      %v1848 = vpack.c.bf16 %v1828, %v1827
      %v1849 = vpack.c.bf16 %v1830, %v1829
      %v1850 = vpack.c.bf16 %v1832, %v1831
      %v1851 = vpack.c.bf16 %v1834, %v1833
      %v1852 = vpack.c.bf16 %v1836, %v1835
      %v1853 = vpack.c.bf16 %v1838, %v1837
      %v1854 = vpack.c.bf16 %v1840, %v1839
      %s1855 = scalar_lea.vmem %s2, 12
      %v1856 = vld [vmem:[%s1855] sm:$0x3]
      %v1858 = vsel %vm659, %v1841, 0
      %v1861 = vsel %vm659, %v1842, 0
      %v1864 = vsel %vm659, %v1843, 0
      %v1867 = vsel %vm659, %v1844, 0
      %v1870 = vsel %vm659, %v1845, 0
      %v1873 = vsel %vm659, %v1846, 0
      %v1876 = vsel %vm659, %v1847, 0
      %v1879 = vsel %vm659, %v1848, 0
      %v1882 = vsel %vm659, %v1849, 0
      %v1885 = vsel %vm659, %v1850, 0
      %v1888 = vsel %vm659, %v1851, 0
      %v1891 = vsel %vm659, %v1852, 0
      %v1894 = vsel %vm659, %v1853, 0
      %v1897 = vsel %vm659, %v1854, 0
      %v1900 = vsel %vm822, %v1856, 0
      %1902 = vmatpush.bf16.msra.mxu0 0
      %1903 = vmatpush.bf16.msra.mxu0 0
      %1904 = vmatpush.bf16.msra.mxu0 0
      %1905 = vmatpush.bf16.msra.mxu0 0
      %1906 = vmatpush.bf16.msra.mxu0 0
      %1907 = vmatpush.bf16.msra.mxu0 0
      %1908 = vmatpush.bf16.msra.mxu0 0
      %1909 = vmatpush.bf16.msra.mxu0 %v1900
      %1910 = vmatmul.bf16.gmra.mxu0 %v1858
      %v1911 = vpop.f32.mrf.mxu0
      %v1912 = vadd.f32 0.0, %v1911
      %v1913 = vpop.f32.mrf.mxu0
      %v1914 = vadd.f32 0.0, %v1913
      %1915 = vmatmul.bf16.gmra.mxu0 %v1861
      %v1916 = vpop.f32.mrf.mxu0
      %v1917 = vadd.f32 0.0, %v1916
      %v1918 = vpop.f32.mrf.mxu0
      %v1919 = vadd.f32 0.0, %v1918
      %1920 = vmatmul.bf16.gmra.mxu0 %v1864
      %v1921 = vpop.f32.mrf.mxu0
      %v1922 = vadd.f32 0.0, %v1921
      %v1923 = vpop.f32.mrf.mxu0
      %v1924 = vadd.f32 0.0, %v1923
      %1925 = vmatmul.bf16.gmra.mxu0 %v1867
      %v1926 = vpop.f32.mrf.mxu0
      %v1927 = vadd.f32 0.0, %v1926
      %v1928 = vpop.f32.mrf.mxu0
      %v1929 = vadd.f32 0.0, %v1928
      %1930 = vmatmul.bf16.gmra.mxu0 %v1870
      %v1931 = vpop.f32.mrf.mxu0
      %v1932 = vadd.f32 0.0, %v1931
      %v1933 = vpop.f32.mrf.mxu0
      %v1934 = vadd.f32 0.0, %v1933
      %1935 = vmatmul.bf16.gmra.mxu0 %v1873
      %v1936 = vpop.f32.mrf.mxu0
      %v1937 = vadd.f32 0.0, %v1936
      %v1938 = vpop.f32.mrf.mxu0
      %v1939 = vadd.f32 0.0, %v1938
      %1940 = vmatmul.bf16.gmra.mxu0 %v1876
      %v1941 = vpop.f32.mrf.mxu0
      %v1942 = vadd.f32 0.0, %v1941
      %v1943 = vpop.f32.mrf.mxu0
      %v1944 = vadd.f32 0.0, %v1943
      %1945 = vmatmul.bf16.gmra.mxu0 %v1879
      %v1946 = vpop.f32.mrf.mxu0
      %v1947 = vadd.f32 0.0, %v1946
      %v1948 = vpop.f32.mrf.mxu0
      %v1949 = vadd.f32 0.0, %v1948
      %1950 = vmatmul.bf16.gmra.mxu0 %v1882
      %v1951 = vpop.f32.mrf.mxu0
      %v1952 = vadd.f32 0.0, %v1951
      %v1953 = vpop.f32.mrf.mxu0
      %v1954 = vadd.f32 0.0, %v1953
      %1955 = vmatmul.bf16.gmra.mxu0 %v1885
      %v1956 = vpop.f32.mrf.mxu0
      %v1957 = vadd.f32 0.0, %v1956
      %v1958 = vpop.f32.mrf.mxu0
      %v1959 = vadd.f32 0.0, %v1958
      %1960 = vmatmul.bf16.gmra.mxu0 %v1888
      %v1961 = vpop.f32.mrf.mxu0
      %v1962 = vadd.f32 0.0, %v1961
      %v1963 = vpop.f32.mrf.mxu0
      %v1964 = vadd.f32 0.0, %v1963
      %1965 = vmatmul.bf16.gmra.mxu0 %v1891
      %v1966 = vpop.f32.mrf.mxu0
      %v1967 = vadd.f32 0.0, %v1966
      %v1968 = vpop.f32.mrf.mxu0
      %v1969 = vadd.f32 0.0, %v1968
      %1970 = vmatmul.bf16.gmra.mxu0 %v1894
      %v1971 = vpop.f32.mrf.mxu0
      %v1972 = vadd.f32 0.0, %v1971
      %v1973 = vpop.f32.mrf.mxu0
      %v1974 = vadd.f32 0.0, %v1973
      %1975 = vmatmul.bf16.gmra.mxu0 %v1897
      %v1976 = vpop.f32.mrf.mxu0
      %v1977 = vadd.f32 0.0, %v1976
      %v1978 = vpop.f32.mrf.mxu0
      %v1979 = vadd.f32 0.0, %v1978
      %1980 = vdwg.mxu0
      %v1981 = vadd.f32 %v1785, %v1912
      %v1982 = vadd.f32 %v1786, %v1914
      %v1983 = vadd.f32 %v1787, %v1917
      %v1984 = vadd.f32 %v1788, %v1919
      %v1985 = vadd.f32 %v1789, %v1922
      %v1986 = vadd.f32 %v1790, %v1924
      %v1987 = vadd.f32 %v1791, %v1927
      %v1988 = vadd.f32 %v1792, %v1929
      %v1989 = vadd.f32 %v1793, %v1932
      %v1990 = vadd.f32 %v1794, %v1934
      %v1991 = vadd.f32 %v1795, %v1937
      %v1992 = vadd.f32 %v1796, %v1939
      %v1993 = vadd.f32 %v1797, %v1942
      %v1994 = vadd.f32 %v1798, %v1944
      %v1995 = vadd.f32 %v1799, %v1947
      %v1996 = vadd.f32 %v1800, %v1949
      %v1997 = vadd.f32 %v1801, %v1952
      %v1998 = vadd.f32 %v1802, %v1954
      %v1999 = vadd.f32 %v1803, %v1957
      %v2000 = vadd.f32 %v1804, %v1959
      %v2001 = vadd.f32 %v1805, %v1962
      %v2002 = vadd.f32 %v1806, %v1964
      %v2003 = vadd.f32 %v1807, %v1967
      %v2004 = vadd.f32 %v1808, %v1969
      %v2005 = vadd.f32 %v1809, %v1972
      %v2006 = vadd.f32 %v1810, %v1974
      %v2007 = vadd.f32 %v1811, %v1977
      %v2008 = vadd.f32 %v1812, %v1979
      %v2009 = vld [vmem:[#allocation2 + $0x21] sm:$0xff]
      %v2010 = vld [vmem:[#allocation2 + $0x29] sm:$0xff]
      %v2011 = vld [vmem:[#allocation2 + $0x31] sm:$0xff]
      %v2012 = vld [vmem:[#allocation2 + $0x39] sm:$0xff]
      %v2013 = vld [vmem:[#allocation2 + $0x41] sm:$0xff]
      %v2014 = vld [vmem:[#allocation2 + $0x49] sm:$0xff]
      %v2015 = vld [vmem:[#allocation2 + $0x51] sm:$0xff]
      %v2016 = vld [vmem:[#allocation2 + $0x59] sm:$0xff]
      %v2017 = vld [vmem:[#allocation2 + $0x61] sm:$0xff]
      %v2018 = vld [vmem:[#allocation2 + $0x69] sm:$0xff]
      %v2019 = vld [vmem:[#allocation2 + $0x71] sm:$0xff]
      %v2020 = vld [vmem:[#allocation2 + $0x79] sm:$0xff]
      %v2021 = vld [vmem:[#allocation2 + $0x81] sm:$0xff]
      %v2022 = vld [vmem:[#allocation2 + $0x89] sm:$0xff]
      %v2023 = vld [vmem:[#allocation2 + $0x91] sm:$0xff]
      %v2024 = vld [vmem:[#allocation2 + $0x99] sm:$0xff]
      %v2025 = vld [vmem:[#allocation2 + $0xa1] sm:$0xff]
      %v2026 = vld [vmem:[#allocation2 + $0xa9] sm:$0xff]
      %v2027 = vld [vmem:[#allocation2 + $0xb1] sm:$0xff]
      %v2028 = vld [vmem:[#allocation2 + $0xb9] sm:$0xff]
      %v2029 = vld [vmem:[#allocation2 + $0xc1] sm:$0xff]
      %v2030 = vld [vmem:[#allocation2 + $0xc9] sm:$0xff]
      %v2031 = vld [vmem:[#allocation2 + $0xd1] sm:$0xff]
      %v2032 = vld [vmem:[#allocation2 + $0xd9] sm:$0xff]
      %v2033 = vld [vmem:[#allocation2 + $0xe1] sm:$0xff]
      %v2034 = vld [vmem:[#allocation2 + $0xe9] sm:$0xff]
      %v2035 = vld [vmem:[#allocation2 + $0xf1] sm:$0xff]
      %v2036 = vld [vmem:[#allocation2 + $0xf9] sm:$0xff]
      %v2037 = vpack.c.bf16 %v2010, %v2009
      %v2038 = vpack.c.bf16 %v2012, %v2011
      %v2039 = vpack.c.bf16 %v2014, %v2013
      %v2040 = vpack.c.bf16 %v2016, %v2015
      %v2041 = vpack.c.bf16 %v2018, %v2017
      %v2042 = vpack.c.bf16 %v2020, %v2019
      %v2043 = vpack.c.bf16 %v2022, %v2021
      %v2044 = vpack.c.bf16 %v2024, %v2023
      %v2045 = vpack.c.bf16 %v2026, %v2025
      %v2046 = vpack.c.bf16 %v2028, %v2027
      %v2047 = vpack.c.bf16 %v2030, %v2029
      %v2048 = vpack.c.bf16 %v2032, %v2031
      %v2049 = vpack.c.bf16 %v2034, %v2033
      %v2050 = vpack.c.bf16 %v2036, %v2035
      %s2051 = scalar_lea.vmem %s2, 14
      %v2052 = vld [vmem:[%s2051] sm:$0x3]
      %v2054 = vsel %vm659, %v2037, 0
      %v2057 = vsel %vm659, %v2038, 0
      %v2060 = vsel %vm659, %v2039, 0
      %v2063 = vsel %vm659, %v2040, 0
      %v2066 = vsel %vm659, %v2041, 0
      %v2069 = vsel %vm659, %v2042, 0
      %v2072 = vsel %vm659, %v2043, 0
      %v2075 = vsel %vm659, %v2044, 0
      %v2078 = vsel %vm659, %v2045, 0
      %v2081 = vsel %vm659, %v2046, 0
      %v2084 = vsel %vm659, %v2047, 0
      %v2087 = vsel %vm659, %v2048, 0
      %v2090 = vsel %vm659, %v2049, 0
      %v2093 = vsel %vm659, %v2050, 0
      %v2096 = vsel %vm822, %v2052, 0
      %2098 = vmatpush.bf16.msra.mxu0 0
      %2099 = vmatpush.bf16.msra.mxu0 0
      %2100 = vmatpush.bf16.msra.mxu0 0
      %2101 = vmatpush.bf16.msra.mxu0 0
      %2102 = vmatpush.bf16.msra.mxu0 0
      %2103 = vmatpush.bf16.msra.mxu0 0
      %2104 = vmatpush.bf16.msra.mxu0 0
      %2105 = vmatpush.bf16.msra.mxu0 %v2096
      %2106 = vmatmul.bf16.gmra.mxu0 %v2054
      %v2107 = vpop.f32.mrf.mxu0
      %v2108 = vadd.f32 0.0, %v2107
      %v2109 = vpop.f32.mrf.mxu0
      %v2110 = vadd.f32 0.0, %v2109
      %2111 = vmatmul.bf16.gmra.mxu0 %v2057
      %v2112 = vpop.f32.mrf.mxu0
      %v2113 = vadd.f32 0.0, %v2112
      %v2114 = vpop.f32.mrf.mxu0
      %v2115 = vadd.f32 0.0, %v2114
      %2116 = vmatmul.bf16.gmra.mxu0 %v2060
      %v2117 = vpop.f32.mrf.mxu0
      %v2118 = vadd.f32 0.0, %v2117
      %v2119 = vpop.f32.mrf.mxu0
      %v2120 = vadd.f32 0.0, %v2119
      %2121 = vmatmul.bf16.gmra.mxu0 %v2063
      %v2122 = vpop.f32.mrf.mxu0
      %v2123 = vadd.f32 0.0, %v2122
      %v2124 = vpop.f32.mrf.mxu0
      %v2125 = vadd.f32 0.0, %v2124
      %2126 = vmatmul.bf16.gmra.mxu0 %v2066
      %v2127 = vpop.f32.mrf.mxu0
      %v2128 = vadd.f32 0.0, %v2127
      %v2129 = vpop.f32.mrf.mxu0
      %v2130 = vadd.f32 0.0, %v2129
      %2131 = vmatmul.bf16.gmra.mxu0 %v2069
      %v2132 = vpop.f32.mrf.mxu0
      %v2133 = vadd.f32 0.0, %v2132
      %v2134 = vpop.f32.mrf.mxu0
      %v2135 = vadd.f32 0.0, %v2134
      %2136 = vmatmul.bf16.gmra.mxu0 %v2072
      %v2137 = vpop.f32.mrf.mxu0
      %v2138 = vadd.f32 0.0, %v2137
      %v2139 = vpop.f32.mrf.mxu0
      %v2140 = vadd.f32 0.0, %v2139
      %2141 = vmatmul.bf16.gmra.mxu0 %v2075
      %v2142 = vpop.f32.mrf.mxu0
      %v2143 = vadd.f32 0.0, %v2142
      %v2144 = vpop.f32.mrf.mxu0
      %v2145 = vadd.f32 0.0, %v2144
      %2146 = vmatmul.bf16.gmra.mxu0 %v2078
      %v2147 = vpop.f32.mrf.mxu0
      %v2148 = vadd.f32 0.0, %v2147
      %v2149 = vpop.f32.mrf.mxu0
      %v2150 = vadd.f32 0.0, %v2149
      %2151 = vmatmul.bf16.gmra.mxu0 %v2081
      %v2152 = vpop.f32.mrf.mxu0
      %v2153 = vadd.f32 0.0, %v2152
      %v2154 = vpop.f32.mrf.mxu0
      %v2155 = vadd.f32 0.0, %v2154
      %2156 = vmatmul.bf16.gmra.mxu0 %v2084
      %v2157 = vpop.f32.mrf.mxu0
      %v2158 = vadd.f32 0.0, %v2157
      %v2159 = vpop.f32.mrf.mxu0
      %v2160 = vadd.f32 0.0, %v2159
      %2161 = vmatmul.bf16.gmra.mxu0 %v2087
      %v2162 = vpop.f32.mrf.mxu0
      %v2163 = vadd.f32 0.0, %v2162
      %v2164 = vpop.f32.mrf.mxu0
      %v2165 = vadd.f32 0.0, %v2164
      %2166 = vmatmul.bf16.gmra.mxu0 %v2090
      %v2167 = vpop.f32.mrf.mxu0
      %v2168 = vadd.f32 0.0, %v2167
      %v2169 = vpop.f32.mrf.mxu0
      %v2170 = vadd.f32 0.0, %v2169
      %2171 = vmatmul.bf16.gmra.mxu0 %v2093
      %v2172 = vpop.f32.mrf.mxu0
      %v2173 = vadd.f32 0.0, %v2172
      %v2174 = vpop.f32.mrf.mxu0
      %v2175 = vadd.f32 0.0, %v2174
      %2176 = vdwg.mxu0
      %v2177 = vadd.f32 %v1981, %v2108
      %v2178 = vadd.f32 %v1982, %v2110
      %v2179 = vadd.f32 %v1983, %v2113
      %v2180 = vadd.f32 %v1984, %v2115
      %v2181 = vadd.f32 %v1985, %v2118
      %v2182 = vadd.f32 %v1986, %v2120
      %v2183 = vadd.f32 %v1987, %v2123
      %v2184 = vadd.f32 %v1988, %v2125
      %v2185 = vadd.f32 %v1989, %v2128
      %v2186 = vadd.f32 %v1990, %v2130
      %v2187 = vadd.f32 %v1991, %v2133
      %v2188 = vadd.f32 %v1992, %v2135
      %v2189 = vadd.f32 %v1993, %v2138
      %v2190 = vadd.f32 %v1994, %v2140
      %v2191 = vadd.f32 %v1995, %v2143
      %v2192 = vadd.f32 %v1996, %v2145
      %v2193 = vadd.f32 %v1997, %v2148
      %v2194 = vadd.f32 %v1998, %v2150
      %v2195 = vadd.f32 %v1999, %v2153
      %v2196 = vadd.f32 %v2000, %v2155
      %v2197 = vadd.f32 %v2001, %v2158
      %v2198 = vadd.f32 %v2002, %v2160
      %v2199 = vadd.f32 %v2003, %v2163
      %v2200 = vadd.f32 %v2004, %v2165
      %v2201 = vadd.f32 %v2005, %v2168
      %v2202 = vadd.f32 %v2006, %v2170
      %v2203 = vadd.f32 %v2007, %v2173
      %v2204 = vadd.f32 %v2008, %v2175
      %v2205 = vld [vmem:[#allocation2 + $0x22] sm:$0xff]
      %v2206 = vld [vmem:[#allocation2 + $0x2a] sm:$0xff]
      %v2207 = vld [vmem:[#allocation2 + $0x32] sm:$0xff]
      %v2208 = vld [vmem:[#allocation2 + $0x3a] sm:$0xff]
      %v2209 = vld [vmem:[#allocation2 + $0x42] sm:$0xff]
      %v2210 = vld [vmem:[#allocation2 + $0x4a] sm:$0xff]
      %v2211 = vld [vmem:[#allocation2 + $0x52] sm:$0xff]
      %v2212 = vld [vmem:[#allocation2 + $0x5a] sm:$0xff]
      %v2213 = vld [vmem:[#allocation2 + $0x62] sm:$0xff]
      %v2214 = vld [vmem:[#allocation2 + $0x6a] sm:$0xff]
      %v2215 = vld [vmem:[#allocation2 + $0x72] sm:$0xff]
      %v2216 = vld [vmem:[#allocation2 + $0x7a] sm:$0xff]
      %v2217 = vld [vmem:[#allocation2 + $0x82] sm:$0xff]
      %v2218 = vld [vmem:[#allocation2 + $0x8a] sm:$0xff]
      %v2219 = vld [vmem:[#allocation2 + $0x92] sm:$0xff]
      %v2220 = vld [vmem:[#allocation2 + $0x9a] sm:$0xff]
      %v2221 = vld [vmem:[#allocation2 + $0xa2] sm:$0xff]
      %v2222 = vld [vmem:[#allocation2 + $0xaa] sm:$0xff]
      %v2223 = vld [vmem:[#allocation2 + $0xb2] sm:$0xff]
      %v2224 = vld [vmem:[#allocation2 + $0xba] sm:$0xff]
      %v2225 = vld [vmem:[#allocation2 + $0xc2] sm:$0xff]
      %v2226 = vld [vmem:[#allocation2 + $0xca] sm:$0xff]
      %v2227 = vld [vmem:[#allocation2 + $0xd2] sm:$0xff]
      %v2228 = vld [vmem:[#allocation2 + $0xda] sm:$0xff]
      %v2229 = vld [vmem:[#allocation2 + $0xe2] sm:$0xff]
      %v2230 = vld [vmem:[#allocation2 + $0xea] sm:$0xff]
      %v2231 = vld [vmem:[#allocation2 + $0xf2] sm:$0xff]
      %v2232 = vld [vmem:[#allocation2 + $0xfa] sm:$0xff]
      %v2233 = vpack.c.bf16 %v2206, %v2205
      %v2234 = vpack.c.bf16 %v2208, %v2207
      %v2235 = vpack.c.bf16 %v2210, %v2209
      %v2236 = vpack.c.bf16 %v2212, %v2211
      %v2237 = vpack.c.bf16 %v2214, %v2213
      %v2238 = vpack.c.bf16 %v2216, %v2215
      %v2239 = vpack.c.bf16 %v2218, %v2217
      %v2240 = vpack.c.bf16 %v2220, %v2219
      %v2241 = vpack.c.bf16 %v2222, %v2221
      %v2242 = vpack.c.bf16 %v2224, %v2223
      %v2243 = vpack.c.bf16 %v2226, %v2225
      %v2244 = vpack.c.bf16 %v2228, %v2227
      %v2245 = vpack.c.bf16 %v2230, %v2229
      %v2246 = vpack.c.bf16 %v2232, %v2231
      %s2247 = scalar_lea.vmem %s2, 16
      %v2248 = vld [vmem:[%s2247] sm:$0x3]
      %v2250 = vsel %vm659, %v2233, 0
      %v2253 = vsel %vm659, %v2234, 0
      %v2256 = vsel %vm659, %v2235, 0
      %v2259 = vsel %vm659, %v2236, 0
      %v2262 = vsel %vm659, %v2237, 0
      %v2265 = vsel %vm659, %v2238, 0
      %v2268 = vsel %vm659, %v2239, 0
      %v2271 = vsel %vm659, %v2240, 0
      %v2274 = vsel %vm659, %v2241, 0
      %v2277 = vsel %vm659, %v2242, 0
      %v2280 = vsel %vm659, %v2243, 0
      %v2283 = vsel %vm659, %v2244, 0
      %v2286 = vsel %vm659, %v2245, 0
      %v2289 = vsel %vm659, %v2246, 0
      %v2292 = vsel %vm822, %v2248, 0
      %2294 = vmatpush.bf16.msra.mxu0 0
      %2295 = vmatpush.bf16.msra.mxu0 0
      %2296 = vmatpush.bf16.msra.mxu0 0
      %2297 = vmatpush.bf16.msra.mxu0 0
      %2298 = vmatpush.bf16.msra.mxu0 0
      %2299 = vmatpush.bf16.msra.mxu0 0
      %2300 = vmatpush.bf16.msra.mxu0 0
      %2301 = vmatpush.bf16.msra.mxu0 %v2292
      %2302 = vmatmul.bf16.gmra.mxu0 %v2250
      %v2303 = vpop.f32.mrf.mxu0
      %v2304 = vadd.f32 0.0, %v2303
      %v2305 = vpop.f32.mrf.mxu0
      %v2306 = vadd.f32 0.0, %v2305
      %2307 = vmatmul.bf16.gmra.mxu0 %v2253
      %v2308 = vpop.f32.mrf.mxu0
      %v2309 = vadd.f32 0.0, %v2308
      %v2310 = vpop.f32.mrf.mxu0
      %v2311 = vadd.f32 0.0, %v2310
      %2312 = vmatmul.bf16.gmra.mxu0 %v2256
      %v2313 = vpop.f32.mrf.mxu0
      %v2314 = vadd.f32 0.0, %v2313
      %v2315 = vpop.f32.mrf.mxu0
      %v2316 = vadd.f32 0.0, %v2315
      %2317 = vmatmul.bf16.gmra.mxu0 %v2259
      %v2318 = vpop.f32.mrf.mxu0
      %v2319 = vadd.f32 0.0, %v2318
      %v2320 = vpop.f32.mrf.mxu0
      %v2321 = vadd.f32 0.0, %v2320
      %2322 = vmatmul.bf16.gmra.mxu0 %v2262
      %v2323 = vpop.f32.mrf.mxu0
      %v2324 = vadd.f32 0.0, %v2323
      %v2325 = vpop.f32.mrf.mxu0
      %v2326 = vadd.f32 0.0, %v2325
      %2327 = vmatmul.bf16.gmra.mxu0 %v2265
      %v2328 = vpop.f32.mrf.mxu0
      %v2329 = vadd.f32 0.0, %v2328
      %v2330 = vpop.f32.mrf.mxu0
      %v2331 = vadd.f32 0.0, %v2330
      %2332 = vmatmul.bf16.gmra.mxu0 %v2268
      %v2333 = vpop.f32.mrf.mxu0
      %v2334 = vadd.f32 0.0, %v2333
      %v2335 = vpop.f32.mrf.mxu0
      %v2336 = vadd.f32 0.0, %v2335
      %2337 = vmatmul.bf16.gmra.mxu0 %v2271
      %v2338 = vpop.f32.mrf.mxu0
      %v2339 = vadd.f32 0.0, %v2338
      %v2340 = vpop.f32.mrf.mxu0
      %v2341 = vadd.f32 0.0, %v2340
      %2342 = vmatmul.bf16.gmra.mxu0 %v2274
      %v2343 = vpop.f32.mrf.mxu0
      %v2344 = vadd.f32 0.0, %v2343
      %v2345 = vpop.f32.mrf.mxu0
      %v2346 = vadd.f32 0.0, %v2345
      %2347 = vmatmul.bf16.gmra.mxu0 %v2277
      %v2348 = vpop.f32.mrf.mxu0
      %v2349 = vadd.f32 0.0, %v2348
      %v2350 = vpop.f32.mrf.mxu0
      %v2351 = vadd.f32 0.0, %v2350
      %2352 = vmatmul.bf16.gmra.mxu0 %v2280
      %v2353 = vpop.f32.mrf.mxu0
      %v2354 = vadd.f32 0.0, %v2353
      %v2355 = vpop.f32.mrf.mxu0
      %v2356 = vadd.f32 0.0, %v2355
      %2357 = vmatmul.bf16.gmra.mxu0 %v2283
      %v2358 = vpop.f32.mrf.mxu0
      %v2359 = vadd.f32 0.0, %v2358
      %v2360 = vpop.f32.mrf.mxu0
      %v2361 = vadd.f32 0.0, %v2360
      %2362 = vmatmul.bf16.gmra.mxu0 %v2286
      %v2363 = vpop.f32.mrf.mxu0
      %v2364 = vadd.f32 0.0, %v2363
      %v2365 = vpop.f32.mrf.mxu0
      %v2366 = vadd.f32 0.0, %v2365
      %2367 = vmatmul.bf16.gmra.mxu0 %v2289
      %v2368 = vpop.f32.mrf.mxu0
      %v2369 = vadd.f32 0.0, %v2368
      %v2370 = vpop.f32.mrf.mxu0
      %v2371 = vadd.f32 0.0, %v2370
      %2372 = vdwg.mxu0
      %v2373 = vadd.f32 %v2177, %v2304
      %v2374 = vadd.f32 %v2178, %v2306
      %v2375 = vadd.f32 %v2179, %v2309
      %v2376 = vadd.f32 %v2180, %v2311
      %v2377 = vadd.f32 %v2181, %v2314
      %v2378 = vadd.f32 %v2182, %v2316
      %v2379 = vadd.f32 %v2183, %v2319
      %v2380 = vadd.f32 %v2184, %v2321
      %v2381 = vadd.f32 %v2185, %v2324
      %v2382 = vadd.f32 %v2186, %v2326
      %v2383 = vadd.f32 %v2187, %v2329
      %v2384 = vadd.f32 %v2188, %v2331
      %v2385 = vadd.f32 %v2189, %v2334
      %v2386 = vadd.f32 %v2190, %v2336
      %v2387 = vadd.f32 %v2191, %v2339
      %v2388 = vadd.f32 %v2192, %v2341
      %v2389 = vadd.f32 %v2193, %v2344
      %v2390 = vadd.f32 %v2194, %v2346
      %v2391 = vadd.f32 %v2195, %v2349
      %v2392 = vadd.f32 %v2196, %v2351
      %v2393 = vadd.f32 %v2197, %v2354
      %v2394 = vadd.f32 %v2198, %v2356
      %v2395 = vadd.f32 %v2199, %v2359
      %v2396 = vadd.f32 %v2200, %v2361
      %v2397 = vadd.f32 %v2201, %v2364
      %v2398 = vadd.f32 %v2202, %v2366
      %v2399 = vadd.f32 %v2203, %v2369
      %v2400 = vadd.f32 %v2204, %v2371
      %v2401 = vld [vmem:[%s6] sm:$0x1]
      %v2403 = vperm.slane %v2401, 0
      %v2405 = vmul.f32 %v2373, %v2403
      %v2406 = vmul.f32 %v2374, %v2403
      %v2407 = vmul.f32 %v2375, %v2403
      %v2408 = vmul.f32 %v2376, %v2403
      %v2409 = vmul.f32 %v2377, %v2403
      %v2410 = vmul.f32 %v2378, %v2403
      %v2411 = vmul.f32 %v2379, %v2403
      %v2412 = vmul.f32 %v2380, %v2403
      %v2413 = vmul.f32 %v2381, %v2403
      %v2414 = vmul.f32 %v2382, %v2403
      %v2415 = vmul.f32 %v2383, %v2403
      %v2416 = vmul.f32 %v2384, %v2403
      %v2417 = vmul.f32 %v2385, %v2403
      %v2418 = vmul.f32 %v2386, %v2403
      %v2419 = vmul.f32 %v2387, %v2403
      %v2420 = vmul.f32 %v2388, %v2403
      %v2421 = vmul.f32 %v2389, %v2403
      %v2422 = vmul.f32 %v2390, %v2403
      %v2423 = vmul.f32 %v2391, %v2403
      %v2424 = vmul.f32 %v2392, %v2403
      %v2425 = vmul.f32 %v2393, %v2403
      %v2426 = vmul.f32 %v2394, %v2403
      %v2427 = vmul.f32 %v2395, %v2403
      %v2428 = vmul.f32 %v2396, %v2403
      %v2429 = vmul.f32 %v2397, %v2403
      %v2430 = vmul.f32 %v2398, %v2403
      %v2431 = vmul.f32 %v2399, %v2403
      %v2432 = vmul.f32 %v2400, %v2403
      %v2433 = vld [vmem:[%s7] sm:$0x1]
      %v2435 = vperm.slane %v2433, 0
      %v2437 = vadd.f32 %v2405, %v2435
      %v2438 = vadd.f32 %v2406, %v2435
      %v2439 = vadd.f32 %v2407, %v2435
      %v2440 = vadd.f32 %v2408, %v2435
      %v2441 = vadd.f32 %v2409, %v2435
      %v2442 = vadd.f32 %v2410, %v2435
      %v2443 = vadd.f32 %v2411, %v2435
      %v2444 = vadd.f32 %v2412, %v2435
      %v2445 = vadd.f32 %v2413, %v2435
      %v2446 = vadd.f32 %v2414, %v2435
      %v2447 = vadd.f32 %v2415, %v2435
      %v2448 = vadd.f32 %v2416, %v2435
      %v2449 = vadd.f32 %v2417, %v2435
      %v2450 = vadd.f32 %v2418, %v2435
      %v2451 = vadd.f32 %v2419, %v2435
      %v2452 = vadd.f32 %v2420, %v2435
      %v2453 = vadd.f32 %v2421, %v2435
      %v2454 = vadd.f32 %v2422, %v2435
      %v2455 = vadd.f32 %v2423, %v2435
      %v2456 = vadd.f32 %v2424, %v2435
      %v2457 = vadd.f32 %v2425, %v2435
      %v2458 = vadd.f32 %v2426, %v2435
      %v2459 = vadd.f32 %v2427, %v2435
      %v2460 = vadd.f32 %v2428, %v2435
      %v2461 = vadd.f32 %v2429, %v2435
      %v2462 = vadd.f32 %v2430, %v2435
      %v2463 = vadd.f32 %v2431, %v2435
      %v2464 = vadd.f32 %v2432, %v2435
      %v2465 = vmax.f32 %v2437, 0.0
      %v2466 = vmax.f32 %v2438, 0.0
      %v2467 = vmax.f32 %v2439, 0.0
      %v2468 = vmax.f32 %v2440, 0.0
      %v2469 = vmax.f32 %v2441, 0.0
      %v2470 = vmax.f32 %v2442, 0.0
      %v2471 = vmax.f32 %v2443, 0.0
      %v2472 = vmax.f32 %v2444, 0.0
      %v2473 = vmax.f32 %v2445, 0.0
      %v2474 = vmax.f32 %v2446, 0.0
      %v2475 = vmax.f32 %v2447, 0.0
      %v2476 = vmax.f32 %v2448, 0.0
      %v2477 = vmax.f32 %v2449, 0.0
      %v2478 = vmax.f32 %v2450, 0.0
      %v2479 = vmax.f32 %v2451, 0.0
      %v2480 = vmax.f32 %v2452, 0.0
      %v2481 = vmax.f32 %v2453, 0.0
      %v2482 = vmax.f32 %v2454, 0.0
      %v2483 = vmax.f32 %v2455, 0.0
      %v2484 = vmax.f32 %v2456, 0.0
      %v2485 = vmax.f32 %v2457, 0.0
      %v2486 = vmax.f32 %v2458, 0.0
      %v2487 = vmax.f32 %v2459, 0.0
      %v2488 = vmax.f32 %v2460, 0.0
      %v2489 = vmax.f32 %v2461, 0.0
      %v2490 = vmax.f32 %v2462, 0.0
      %v2491 = vmax.f32 %v2463, 0.0
      %v2492 = vmax.f32 %v2464, 0.0
      %v2493 = vpack.c.bf16 %v2466, %v2465
      %v2494 = vpack.c.bf16 %v2468, %v2467
      %v2495 = vpack.c.bf16 %v2470, %v2469
      %v2496 = vpack.c.bf16 %v2472, %v2471
      %v2497 = vpack.c.bf16 %v2474, %v2473
      %v2498 = vpack.c.bf16 %v2476, %v2475
      %v2499 = vpack.c.bf16 %v2478, %v2477
      %v2500 = vpack.c.bf16 %v2480, %v2479
      %v2501 = vpack.c.bf16 %v2482, %v2481
      %v2502 = vpack.c.bf16 %v2484, %v2483
      %v2503 = vpack.c.bf16 %v2486, %v2485
      %v2504 = vpack.c.bf16 %v2488, %v2487
      %v2505 = vpack.c.bf16 %v2490, %v2489
      %v2506 = vpack.c.bf16 %v2492, %v2491
      %v2507 = vld [vmem:[%s3] sm:$0x3]
      %v2509 = vsel %vm659, %v2493, 0
      %v2512 = vsel %vm659, %v2494, 0
      %v2515 = vsel %vm659, %v2495, 0
      %v2518 = vsel %vm659, %v2496, 0
      %v2521 = vsel %vm659, %v2497, 0
      %v2524 = vsel %vm659, %v2498, 0
      %v2527 = vsel %vm659, %v2499, 0
      %v2530 = vsel %vm659, %v2500, 0
      %v2533 = vsel %vm659, %v2501, 0
      %v2536 = vsel %vm659, %v2502, 0
      %v2539 = vsel %vm659, %v2503, 0
      %v2542 = vsel %vm659, %v2504, 0
      %v2545 = vsel %vm659, %v2505, 0
      %v2548 = vsel %vm659, %v2506, 0
      %v2551 = vsel %vm822, %v2507, 0
      %2553 = vmatpush.bf16.msra.mxu0 0
      %2554 = vmatpush.bf16.msra.mxu0 0
      %2555 = vmatpush.bf16.msra.mxu0 0
      %2556 = vmatpush.bf16.msra.mxu0 0
      %2557 = vmatpush.bf16.msra.mxu0 0
      %2558 = vmatpush.bf16.msra.mxu0 0
      %2559 = vmatpush.bf16.msra.mxu0 0
      %2560 = vmatpush.bf16.msra.mxu0 %v2551
      %2561 = vmatmul.bf16.gmra.mxu0 %v2509
      %v2562 = vpop.f32.mrf.mxu0
      %v2563 = vadd.f32 0.0, %v2562
      %v2564 = vpop.f32.mrf.mxu0
      %v2565 = vadd.f32 0.0, %v2564
      %2566 = vmatmul.bf16.gmra.mxu0 %v2512
      %v2567 = vpop.f32.mrf.mxu0
      %v2568 = vadd.f32 0.0, %v2567
      %v2569 = vpop.f32.mrf.mxu0
      %v2570 = vadd.f32 0.0, %v2569
      %2571 = vmatmul.bf16.gmra.mxu0 %v2515
      %v2572 = vpop.f32.mrf.mxu0
      %v2573 = vadd.f32 0.0, %v2572
      %v2574 = vpop.f32.mrf.mxu0
      %v2575 = vadd.f32 0.0, %v2574
      %2576 = vmatmul.bf16.gmra.mxu0 %v2518
      %v2577 = vpop.f32.mrf.mxu0
      %v2578 = vadd.f32 0.0, %v2577
      %v2579 = vpop.f32.mrf.mxu0
      %v2580 = vadd.f32 0.0, %v2579
      %2581 = vmatmul.bf16.gmra.mxu0 %v2521
      %v2582 = vpop.f32.mrf.mxu0
      %v2583 = vadd.f32 0.0, %v2582
      %v2584 = vpop.f32.mrf.mxu0
      %v2585 = vadd.f32 0.0, %v2584
      %2586 = vmatmul.bf16.gmra.mxu0 %v2524
      %v2587 = vpop.f32.mrf.mxu0
      %v2588 = vadd.f32 0.0, %v2587
      %v2589 = vpop.f32.mrf.mxu0
      %v2590 = vadd.f32 0.0, %v2589
      %2591 = vmatmul.bf16.gmra.mxu0 %v2527
      %v2592 = vpop.f32.mrf.mxu0
      %v2593 = vadd.f32 0.0, %v2592
      %v2594 = vpop.f32.mrf.mxu0
      %v2595 = vadd.f32 0.0, %v2594
      %2596 = vmatmul.bf16.gmra.mxu0 %v2530
      %v2597 = vpop.f32.mrf.mxu0
      %v2598 = vadd.f32 0.0, %v2597
      %v2599 = vpop.f32.mrf.mxu0
      %v2600 = vadd.f32 0.0, %v2599
      %2601 = vmatmul.bf16.gmra.mxu0 %v2533
      %v2602 = vpop.f32.mrf.mxu0
      %v2603 = vadd.f32 0.0, %v2602
      %v2604 = vpop.f32.mrf.mxu0
      %v2605 = vadd.f32 0.0, %v2604
      %2606 = vmatmul.bf16.gmra.mxu0 %v2536
      %v2607 = vpop.f32.mrf.mxu0
      %v2608 = vadd.f32 0.0, %v2607
      %v2609 = vpop.f32.mrf.mxu0
      %v2610 = vadd.f32 0.0, %v2609
      %2611 = vmatmul.bf16.gmra.mxu0 %v2539
      %v2612 = vpop.f32.mrf.mxu0
      %v2613 = vadd.f32 0.0, %v2612
      %v2614 = vpop.f32.mrf.mxu0
      %v2615 = vadd.f32 0.0, %v2614
      %2616 = vmatmul.bf16.gmra.mxu0 %v2542
      %v2617 = vpop.f32.mrf.mxu0
      %v2618 = vadd.f32 0.0, %v2617
      %v2619 = vpop.f32.mrf.mxu0
      %v2620 = vadd.f32 0.0, %v2619
      %2621 = vmatmul.bf16.gmra.mxu0 %v2545
      %v2622 = vpop.f32.mrf.mxu0
      %v2623 = vadd.f32 0.0, %v2622
      %v2624 = vpop.f32.mrf.mxu0
      %v2625 = vadd.f32 0.0, %v2624
      %2626 = vmatmul.bf16.gmra.mxu0 %v2548
      %v2627 = vpop.f32.mrf.mxu0
      %v2628 = vadd.f32 0.0, %v2627
      %v2629 = vpop.f32.mrf.mxu0
      %v2630 = vadd.f32 0.0, %v2629
      %2631 = vdwg.mxu0
      %v2632 = vld [vmem:[%s8] sm:$0x1]
      %v2634 = vperm.slane %v2632, 0
      %v2636 = vmul.f32 %v2563, %v2634
      %v2637 = vmul.f32 %v2565, %v2634
      %v2638 = vmul.f32 %v2568, %v2634
      %v2639 = vmul.f32 %v2570, %v2634
      %v2640 = vmul.f32 %v2573, %v2634
      %v2641 = vmul.f32 %v2575, %v2634
      %v2642 = vmul.f32 %v2578, %v2634
      %v2643 = vmul.f32 %v2580, %v2634
      %v2644 = vmul.f32 %v2583, %v2634
      %v2645 = vmul.f32 %v2585, %v2634
      %v2646 = vmul.f32 %v2588, %v2634
      %v2647 = vmul.f32 %v2590, %v2634
      %v2648 = vmul.f32 %v2593, %v2634
      %v2649 = vmul.f32 %v2595, %v2634
      %v2650 = vmul.f32 %v2598, %v2634
      %v2651 = vmul.f32 %v2600, %v2634
      %v2652 = vmul.f32 %v2603, %v2634
      %v2653 = vmul.f32 %v2605, %v2634
      %v2654 = vmul.f32 %v2608, %v2634
      %v2655 = vmul.f32 %v2610, %v2634
      %v2656 = vmul.f32 %v2613, %v2634
      %v2657 = vmul.f32 %v2615, %v2634
      %v2658 = vmul.f32 %v2618, %v2634
      %v2659 = vmul.f32 %v2620, %v2634
      %v2660 = vmul.f32 %v2623, %v2634
      %v2661 = vmul.f32 %v2625, %v2634
      %v2662 = vmul.f32 %v2628, %v2634
      %v2663 = vmul.f32 %v2630, %v2634
      %v2664 = vld [vmem:[%s9] sm:$0x1]
      %v2666 = vperm.slane %v2664, 0
      %v2668 = vadd.f32 %v2636, %v2666
      %v2669 = vadd.f32 %v2637, %v2666
      %v2670 = vadd.f32 %v2638, %v2666
      %v2671 = vadd.f32 %v2639, %v2666
      %v2672 = vadd.f32 %v2640, %v2666
      %v2673 = vadd.f32 %v2641, %v2666
      %v2674 = vadd.f32 %v2642, %v2666
      %v2675 = vadd.f32 %v2643, %v2666
      %v2676 = vadd.f32 %v2644, %v2666
      %v2677 = vadd.f32 %v2645, %v2666
      %v2678 = vadd.f32 %v2646, %v2666
      %v2679 = vadd.f32 %v2647, %v2666
      %v2680 = vadd.f32 %v2648, %v2666
      %v2681 = vadd.f32 %v2649, %v2666
      %v2682 = vadd.f32 %v2650, %v2666
      %v2683 = vadd.f32 %v2651, %v2666
      %v2684 = vadd.f32 %v2652, %v2666
      %v2685 = vadd.f32 %v2653, %v2666
      %v2686 = vadd.f32 %v2654, %v2666
      %v2687 = vadd.f32 %v2655, %v2666
      %v2688 = vadd.f32 %v2656, %v2666
      %v2689 = vadd.f32 %v2657, %v2666
      %v2690 = vadd.f32 %v2658, %v2666
      %v2691 = vadd.f32 %v2659, %v2666
      %v2692 = vadd.f32 %v2660, %v2666
      %v2693 = vadd.f32 %v2661, %v2666
      %v2694 = vadd.f32 %v2662, %v2666
      %v2695 = vadd.f32 %v2663, %v2666
      %v2696 = vld [vmem:[%s354 + $0x11] sm:$0xff]
      %v2697 = vld [vmem:[%s354 + $0x19] sm:$0xff]
      %v2698 = vld [vmem:[%s354 + $0x21] sm:$0xff]
      %v2699 = vld [vmem:[%s354 + $0x29] sm:$0xff]
      %v2700 = vld [vmem:[%s354 + $0x31] sm:$0xff]
      %v2701 = vld [vmem:[%s354 + $0x39] sm:$0xff]
      %v2702 = vld [vmem:[%s354 + $0x41] sm:$0xff]
      %v2703 = vld [vmem:[%s354 + $0x49] sm:$0xff]
      %v2704 = vld [vmem:[%s354 + $0x51] sm:$0xff]
      %v2705 = vld [vmem:[%s354 + $0x59] sm:$0xff]
      %v2706 = vld [vmem:[%s354 + $0x61] sm:$0xff]
      %v2707 = vld [vmem:[%s354 + $0x69] sm:$0xff]
      %v2708 = vld [vmem:[%s354 + $0x71] sm:$0xff]
      %v2709 = vld [vmem:[%s354 + $0x79] sm:$0xff]
      %v2710 = vld [vmem:[%s354 + $0x81] sm:$0xff]
      %v2711 = vld [vmem:[%s354 + $0x89] sm:$0xff]
      %v2712 = vld [vmem:[%s354 + $0x91] sm:$0xff]
      %v2713 = vld [vmem:[%s354 + $0x99] sm:$0xff]
      %v2714 = vld [vmem:[%s354 + $0xa1] sm:$0xff]
      %v2715 = vld [vmem:[%s354 + $0xa9] sm:$0xff]
      %v2716 = vld [vmem:[%s354 + $0xb1] sm:$0xff]
      %v2717 = vld [vmem:[%s354 + $0xb9] sm:$0xff]
      %v2718 = vld [vmem:[%s354 + $0xc1] sm:$0xff]
      %v2719 = vld [vmem:[%s354 + $0xc9] sm:$0xff]
      %v2720 = vld [vmem:[%s354 + $0xd1] sm:$0xff]
      %v2721 = vld [vmem:[%s354 + $0xd9] sm:$0xff]
      %v2722 = vld [vmem:[%s354 + $0xe1] sm:$0xff]
      %v2723 = vld [vmem:[%s354 + $0xe9] sm:$0xff]
      %v2724 = vadd.f32 %v2668, %v2696
      %v2725 = vadd.f32 %v2669, %v2697
      %v2726 = vadd.f32 %v2670, %v2698
      %v2727 = vadd.f32 %v2671, %v2699
      %v2728 = vadd.f32 %v2672, %v2700
      %v2729 = vadd.f32 %v2673, %v2701
      %v2730 = vadd.f32 %v2674, %v2702
      %v2731 = vadd.f32 %v2675, %v2703
      %v2732 = vadd.f32 %v2676, %v2704
      %v2733 = vadd.f32 %v2677, %v2705
      %v2734 = vadd.f32 %v2678, %v2706
      %v2735 = vadd.f32 %v2679, %v2707
      %v2736 = vadd.f32 %v2680, %v2708
      %v2737 = vadd.f32 %v2681, %v2709
      %v2738 = vadd.f32 %v2682, %v2710
      %v2739 = vadd.f32 %v2683, %v2711
      %v2740 = vadd.f32 %v2684, %v2712
      %v2741 = vadd.f32 %v2685, %v2713
      %v2742 = vadd.f32 %v2686, %v2714
      %v2743 = vadd.f32 %v2687, %v2715
      %v2744 = vadd.f32 %v2688, %v2716
      %v2745 = vadd.f32 %v2689, %v2717
      %v2746 = vadd.f32 %v2690, %v2718
      %v2747 = vadd.f32 %v2691, %v2719
      %v2748 = vadd.f32 %v2692, %v2720
      %v2749 = vadd.f32 %v2693, %v2721
      %v2750 = vadd.f32 %v2694, %v2722
      %v2751 = vadd.f32 %v2695, %v2723
      %v2752 = vmax.f32 %v2724, 0.0
      %v2753 = vmax.f32 %v2725, 0.0
      %v2754 = vmax.f32 %v2726, 0.0
      %v2755 = vmax.f32 %v2727, 0.0
      %v2756 = vmax.f32 %v2728, 0.0
      %v2757 = vmax.f32 %v2729, 0.0
      %v2758 = vmax.f32 %v2730, 0.0
      %v2759 = vmax.f32 %v2731, 0.0
      %v2760 = vmax.f32 %v2732, 0.0
      %v2761 = vmax.f32 %v2733, 0.0
      %v2762 = vmax.f32 %v2734, 0.0
      %v2763 = vmax.f32 %v2735, 0.0
      %v2764 = vmax.f32 %v2736, 0.0
      %v2765 = vmax.f32 %v2737, 0.0
      %v2766 = vmax.f32 %v2738, 0.0
      %v2767 = vmax.f32 %v2739, 0.0
      %v2768 = vmax.f32 %v2740, 0.0
      %v2769 = vmax.f32 %v2741, 0.0
      %v2770 = vmax.f32 %v2742, 0.0
      %v2771 = vmax.f32 %v2743, 0.0
      %v2772 = vmax.f32 %v2744, 0.0
      %v2773 = vmax.f32 %v2745, 0.0
      %v2774 = vmax.f32 %v2746, 0.0
      %v2775 = vmax.f32 %v2747, 0.0
      %v2776 = vmax.f32 %v2748, 0.0
      %v2777 = vmax.f32 %v2749, 0.0
      %v2778 = vmax.f32 %v2750, 0.0
      %v2779 = vmax.f32 %v2751, 0.0
      %2780 = vst.msk [vmem:[%s359] sm:$0xff] %vm417, %v2752
      %2781 = vst.msk [vmem:[%s359 + $0x8] sm:$0xff] %vm417, %v2753
      %2782 = vst.msk [vmem:[%s359 + $0x10] sm:$0xff] %vm417, %v2754
      %2783 = vst.msk [vmem:[%s359 + $0x18] sm:$0xff] %vm417, %v2755
      %2784 = vst.msk [vmem:[%s359 + $0x20] sm:$0xff] %vm417, %v2756
      %2785 = vst.msk [vmem:[%s359 + $0x28] sm:$0xff] %vm417, %v2757
      %2786 = vst.msk [vmem:[%s359 + $0x30] sm:$0xff] %vm417, %v2758
      %2787 = vst.msk [vmem:[%s359 + $0x38] sm:$0xff] %vm417, %v2759
      %2788 = vst.msk [vmem:[%s359 + $0x40] sm:$0xff] %vm417, %v2760
      %2789 = vst.msk [vmem:[%s359 + $0x48] sm:$0xff] %vm417, %v2761
      %2790 = vst.msk [vmem:[%s359 + $0x50] sm:$0xff] %vm417, %v2762
      %2791 = vst.msk [vmem:[%s359 + $0x58] sm:$0xff] %vm417, %v2763
      %2792 = vst.msk [vmem:[%s359 + $0x60] sm:$0xff] %vm417, %v2764
      %2793 = vst.msk [vmem:[%s359 + $0x68] sm:$0xff] %vm417, %v2765
      %2794 = vst.msk [vmem:[%s359 + $0x70] sm:$0xff] %vm417, %v2766
      %2795 = vst.msk [vmem:[%s359 + $0x78] sm:$0xff] %vm417, %v2767
      %2796 = vst.msk [vmem:[%s359 + $0x80] sm:$0xff] %vm417, %v2768
      %2797 = vst.msk [vmem:[%s359 + $0x88] sm:$0xff] %vm417, %v2769
      %2798 = vst.msk [vmem:[%s359 + $0x90] sm:$0xff] %vm417, %v2770
      %2799 = vst.msk [vmem:[%s359 + $0x98] sm:$0xff] %vm417, %v2771
      %2800 = vst.msk [vmem:[%s359 + $0xa0] sm:$0xff] %vm417, %v2772
      %2801 = vst.msk [vmem:[%s359 + $0xa8] sm:$0xff] %vm417, %v2773
      %2802 = vst.msk [vmem:[%s359 + $0xb0] sm:$0xff] %vm417, %v2774
      %2803 = vst.msk [vmem:[%s359 + $0xb8] sm:$0xff] %vm417, %v2775
      %2804 = vst.msk [vmem:[%s359 + $0xc0] sm:$0xff] %vm417, %v2776
      %2805 = vst.msk [vmem:[%s359 + $0xc8] sm:$0xff] %vm417, %v2777
      %2806 = vst.msk [vmem:[%s359 + $0xd0] sm:$0xff] %vm417, %v2778
      %2807 = vst.msk [vmem:[%s359 + $0xd8] sm:$0xff] %vm417, %v2779
      %p2808 = scmp.lt.s32.totalorder %s21, 1
      %s2809 = scalar_select %p2808, %s21, 1
      %s2810 = smul.addr %s2809, 28
      %s2811 = smul.addr %s2810, 8
      %s2812 = scalar_lea.vmem %s10, %s2811
      // Predicated region
      $region61: #{tpu_custom_call.1} parent=59 // pred_check
        %p2813 = pneg %p254
      $region62: #{tpu_custom_call.1} parent=59 // pred_check_branch
        %2815 = sbr.rel (%p2813) target = $region64
      $region63: #{tpu_custom_call.1} parent=59 // pred_region
        _
      $region64: #{tpu_custom_call.1} parent=59 // pred_fallthru
        _
    $region60: #{tpu_custom_call.1} parent=5 // pred_fallthru
      _
    %p2816 = scmp.le.s32.totalorder 2, %s16
    // Predicated region
    $region65: #{tpu_custom_call.1} parent=5 // pred_check
      %p2817 = pneg %p2816
    $region66: #{tpu_custom_call.1} parent=5 // pred_check_branch
      %2819 = sbr.rel (%p2817) target = $region68
    $region67: #{tpu_custom_call.1} parent=5 // pred_region
      %s2820 = ssub.s32 %s16, 2
      // Predicated region
      $region69: #{tpu_custom_call.1} parent=67 // pred_check
        %p2821 = pneg %p260
      $region70: #{tpu_custom_call.1} parent=67 // pred_check_branch
        %2823 = sbr.rel (%p2821) target = $region72
      $region71: #{tpu_custom_call.1} parent=67 // pred_region
        %p2824 = scmp.lt.s32.totalorder %s22, 1
        %s2825 = scalar_select %p2824, %s22, 1
        %s2826 = smul.addr %s2825, 28
        %s2827 = smul.addr %s2826, 8
        %s2828 = scalar_lea.vmem %s10, %s2827
      $region72: #{tpu_custom_call.1} parent=67 // pred_fallthru
        _
    $region68: #{tpu_custom_call.1} parent=5 // pred_fallthru
      _
  $region6: #{tpu_custom_call.1} parent=0 // loop_footer
    %s20 = sadd.s32 1, %s16
  $region7: #{tpu_custom_call.1} parent=0 // loop_footer_branch
    %15 = sbr.rel target = $region3
  $region8: #{tpu_custom_call.1} parent=0 // loop_exit
    _

</llo_original>
